<compile_context>
chip_gen: v6e
topology: v6e:2x2x1
jax: 0.10.0
libtpu: 0.0.40
codegen_flags: <defaults>
</compile_context>

<pallas_src>
import jax
import jax.numpy as jnp
from jax.experimental import pallas as pl
from jax.experimental.pallas import tpu as pltpu


def _lstm_kernel(x_ref, static_ref, w_ref, fc_ref, out_ref):
    TpB, Dp = x_ref.shape
    H4 = w_ref.shape[1]
    H = H4 // 4
    B = out_ref.shape[0]
    Tp = TpB // B
    Ds = static_ref.shape[1]

    # ---- static row offsets inside the packed weight slab
    r1 = Dp              # end of wih0
    r2 = r1 + H          # end of whh0
    r3 = r2 + 2 * H      # end of W1 = [wih1; whh1]

    wih0 = w_ref[0:r1, :]          # (Dp, 4H)
    whh0 = w_ref[r1:r2, :]         # (H, 4H)
    w1 = w_ref[r2:r3, :]           # (2H, 4H)   fused layer-1 weights
    b0 = w_ref[r3:r3 + 1, :]       # (1, 4H)
    b1 = w_ref[r3 + 1:r3 + 2, :]   # (1, 4H)

    # ---- prepass: layer-0 input projection (+ bias) for ALL steps in one MXU
    # call with M = Tp*B rows instead of Tp calls with M = B rows.
    xproj = (jnp.dot(x_ref[...], wih0, preferred_element_type=jnp.float32)
             + jnp.broadcast_to(b0, (TpB, H4)))            # (Tp*B, 4H)

    # loop-invariant broadcast hoisted (JAX does not CSE broadcast_in_dim)
    b1b = jnp.broadcast_to(b1, (B, H4))                     # (B, 4H)

    def cell(gates, c_prev):
        # g-gate pre-activations were pre-scaled by 2 in the packed weights, so
        # tanh(g) = 2*sigmoid(2g) - 1 comes out of ONE full-vreg sigmoid
        # covering all four gates (PyTorch order i, f, g, o).
        s = jax.nn.sigmoid(gates)
        i = s[:, 0 * H:1 * H]
        f = s[:, 1 * H:2 * H]
        g = 2.0 * s[:, 2 * H:3 * H] - 1.0
        o = s[:, 3 * H:4 * H]
        c_new = f * c_prev + i * g
        h_new = o * jnp.tanh(c_new)
        return h_new, c_new

    zeros = jnp.zeros((B, H), jnp.float32)
    h0, c0, h1, c1 = zeros, zeros, zeros, zeros

    # Tp is static and small -> full unroll gives the scheduler visibility to
    # overlap layer-0 VPU/EUP work with layer-1 MXU pushes across steps.
    # (Switch to lax.fori_loop(..., unroll=4) if Tp grows past ~16-32.)
    for t in range(Tp):
        g0 = xproj[t * B:(t + 1) * B, :] + jnp.dot(
            h0, whh0, preferred_element_type=jnp.float32)
        h0, c0 = cell(g0, c0)
        # TODO(synk): inter-layer dropout is training-only; identity at inference.
        h01 = jnp.concatenate([h0, h1], axis=1)             # (B, 2H)
        g1 = jnp.dot(h01, w1, preferred_element_type=jnp.float32) + b1b
        h1, c1 = cell(g1, c1)

    # ---- head: fc([h_last, static]) as two dots (no in-kernel concat needed),
    # written as ONE lane-contiguous (B, 2) slab: column 0 = mu, column 1 = sigma.
    fcw_h = fc_ref[0:H, :]
    fcw_s = fc_ref[H:H + Ds, :]
    fcb = fc_ref[H + Ds:H + Ds + 1, :]
    # TODO(synk): dropout on the concatenated features is training-only.
    head = (jnp.dot(h1, fcw_h, preferred_element_type=jnp.float32)
            + jnp.dot(static_ref[...], fcw_s, preferred_element_type=jnp.float32)
            + fcb)                                          # (B, 2)
    col = jax.lax.broadcasted_iota(jnp.int32, head.shape, 1)
    out_ref[...] = jnp.where(col == 0, head, jax.nn.softplus(head) + 1e-6)


def lstm_model_forward(kernel_params, past_seq, future_seq, static_feat):
    """past_seq: (B, Tp, Dp), static_feat: (B, Ds) -> (mu (B,), sigma (B,))."""
    del future_seq  # unused, mirrors the PyTorch forward
    B, Tp, Dp = past_seq.shape

    # Pad batch to a multiple of 8 (f32 sublane) so each step's row block in
    # the flattened time-major layout is sublane-aligned.
    Bp = ((B + 7) // 8) * 8
    if Bp != B:
        pad = Bp - B
        past_seq = jnp.pad(past_seq, ((0, pad), (0, 0), (0, 0)))
        static_feat = jnp.pad(static_feat, ((0, pad), (0, 0)))

    # time-major, flattened: step t occupies rows [t*Bp, (t+1)*Bp)
    x_flat = jnp.transpose(past_seq, (1, 0, 2)).reshape(Tp * Bp, Dp).astype(jnp.float32)

    vmem = pl.BlockSpec(memory_space=pltpu.MemorySpace.VMEM)
    out = pl.pallas_call(
        _lstm_kernel,
        out_shape=jax.ShapeDtypeStruct((Bp, 2), jnp.float32),
        in_specs=[vmem] * 4,
        out_specs=vmem,
    )(x_flat, static_feat.astype(jnp.float32),
      kernel_params["wpack"], kernel_params["fcpack"])
    return out[:B, 0], out[:B, 1]


def init_params(key, past_dim, static_dim, hidden_dim):
    """Deterministic init mirroring PyTorch nn.LSTM / nn.Linear shapes.

    Returns canonical (x @ W layout) parameters used by the pure-JAX reference.
    """
    H = hidden_dim
    k_lstm = 1.0 / jnp.sqrt(jnp.float32(H))
    k_fc = 1.0 / jnp.sqrt(jnp.float32(H + static_dim))
    keys = jax.random.split(key, 10)

    def u(k, shape, scale):
        return jax.random.uniform(k, shape, jnp.float32, -scale, scale)

    # PyTorch shapes: W_ih_l0 (4H, Dp), W_hh_l0 (4H, H), W_*_l1 (4H, H), biases (4H,)
    w_ih0 = u(keys[0], (4 * H, past_dim), k_lstm)
    w_hh0 = u(keys[1], (4 * H, H), k_lstm)
    b_ih0 = u(keys[2], (4 * H,), k_lstm)
    b_hh0 = u(keys[3], (4 * H,), k_lstm)
    w_ih1 = u(keys[4], (4 * H, H), k_lstm)
    w_hh1 = u(keys[5], (4 * H, H), k_lstm)
    b_ih1 = u(keys[6], (4 * H,), k_lstm)
    b_hh1 = u(keys[7], (4 * H,), k_lstm)
    fc_w = u(keys[8], (2, H + static_dim), k_fc)     # nn.Linear(H+Ds, 2)
    fc_b = u(keys[9], (2,), k_fc)

    return {
        "wih0": w_ih0.T, "whh0": w_hh0.T, "b0": (b_ih0 + b_hh0)[None, :],
        "wih1": w_ih1.T, "whh1": w_hh1.T, "b1": (b_ih1 + b_hh1)[None, :],
        "fcw_h": fc_w[:, :H].T, "fcw_s": fc_w[:, H:].T, "fcb": fc_b[None, :],
    }


def pack_params(params):
    """Pack canonical params into the 2 kernel-side slabs.

    - Folds the tanh-via-sigmoid 2x prescale into the g-gate columns/bias.
    - Fuses layer-1 weights: W1 = [wih1; whh1] -> (2H, 4H).
    - Row-stacks wih0 / whh0 / W1 / b0 / b1 into one (Dp+3H+2, 4H) slab and the
      fc weights/bias into one (H+Ds+1, 2) slab (2 parameter DMAs total).
    """
    H = params["whh0"].shape[0]

    def gscale(w):
        return w.at[..., 2 * H:3 * H].multiply(2.0)

    wih0 = gscale(params["wih0"])
    whh0 = gscale(params["whh0"])
    w1 = gscale(jnp.concatenate([params["wih1"], params["whh1"]], axis=0))
    b0 = gscale(params["b0"])
    b1 = gscale(params["b1"])
    wpack = jnp.concatenate([wih0, whh0, w1, b0, b1], axis=0).astype(jnp.float32)
    fcpack = jnp.concatenate(
        [params["fcw_h"], params["fcw_s"], params["fcb"]], axis=0).astype(jnp.float32)
    return {"wpack": wpack, "fcpack": fcpack}


def reference_forward(params, past_seq, static_feat):
    """Pure-JAX reference of the PyTorch forward (eval mode)."""
    B, Tp, _ = past_seq.shape
    H = params["whh0"].shape[0]

    def cell(x, h, c, wih, whh, b):
        gates = x @ wih + h @ whh + b
        i = jax.nn.sigmoid(gates[:, :H])
        f = jax.nn.sigmoid(gates[:, H:2 * H])
        g = jnp.tanh(gates[:, 2 * H:3 * H])
        o = jax.nn.sigmoid(gates[:, 3 * H:])
        c = f * c + i * g
        h = o * jnp.tanh(c)
        return h, c

    h0 = c0 = h1 = c1 = jnp.zeros((B, H), jnp.float32)
    for t in range(Tp):
        h0, c0 = cell(past_seq[:, t], h0, c0,
                      params["wih0"], params["whh0"], params["b0"])
        h1, c1 = cell(h0, h1, c1,
                      params["wih1"], params["whh1"], params["b1"])
    out = h1 @ params["fcw_h"] + static_feat @ params["fcw_s"] + params["fcb"]
    return out[:, 0], jax.nn.softplus(out[:, 1]) + 1e-6


if __name__ == "__main__":
    # hidden_dim = 64 matches the nn.Module default and fills the 256-wide MXU.
    B, Tp, Dp, Ds, H = 8, 8, 16, 8, 64

    key = jax.random.PRNGKey(0)
    k_past, k_fut, k_static, k_params = jax.random.split(key, 4)
    past_seq = jax.random.normal(k_past, (B, Tp, Dp), jnp.float32)
    future_seq = jax.random.normal(k_fut, (B, Tp, 4), jnp.float32)   # unused by forward
    static_feat = jax.random.normal(k_static, (B, Ds), jnp.float32)
    params = init_params(k_params, Dp, Ds, H)
    kernel_params = pack_params(params)

    mu, sigma = jax.jit(lstm_model_forward)(kernel_params, past_seq,
                                            future_seq, static_feat)
    jax.block_until_ready((mu, sigma))

    mu_ref, sigma_ref = reference_forward(params, past_seq, static_feat)
    assert mu.shape == (B,) and sigma.shape == (B,)
    assert jnp.allclose(mu, mu_ref, atol=1e-4, rtol=1e-4)
    assert jnp.allclose(sigma, sigma_ref, atol=1e-4, rtol=1e-4)

    print("KERNEL_OK")
</pallas_src>

<mosaic_0001>
module attributes {stable_mosaic.version = 11 : i64} {
  func.func @_lstm_kernel(%arg0: memref<64x16xf32, #tpu.memory_space<vmem>>, %arg1: memref<8x8xf32, #tpu.memory_space<vmem>>, %arg2: memref<210x256xf32, #tpu.memory_space<vmem>>, %arg3: memref<73x2xf32, #tpu.memory_space<vmem>>, %arg4: memref<8x2xf32, #tpu.memory_space<vmem>>) attributes {dimension_semantics = [], scalar_prefetch = 0 : i64, scratch_operands = 0 : i64, tpu.core_type = #tpu.core_type<tc>} {
    %c0 = arith.constant 0 : index
    %c0_0 = arith.constant 0 : index
    %0 = vector.load %arg2[%c0, %c0_0] : memref<210x256xf32, #tpu.memory_space<vmem>>, vector<16x256xf32>
    %c16 = arith.constant 16 : index
    %c0_1 = arith.constant 0 : index
    %1 = vector.load %arg2[%c16, %c0_1] : memref<210x256xf32, #tpu.memory_space<vmem>>, vector<64x256xf32>
    %c80 = arith.constant 80 : index
    %c0_2 = arith.constant 0 : index
    %2 = vector.load %arg2[%c80, %c0_2] : memref<210x256xf32, #tpu.memory_space<vmem>>, vector<128x256xf32>
    %c208 = arith.constant 208 : index
    %c0_3 = arith.constant 0 : index
    %3 = vector.load %arg2[%c208, %c0_3] : memref<210x256xf32, #tpu.memory_space<vmem>>, vector<1x256xf32>
    %c209 = arith.constant 209 : index
    %c0_4 = arith.constant 0 : index
    %4 = vector.load %arg2[%c209, %c0_4] : memref<210x256xf32, #tpu.memory_space<vmem>>, vector<1x256xf32>
    %c0_5 = arith.constant 0 : index
    %c0_6 = arith.constant 0 : index
    %5 = vector.load %arg0[%c0_5, %c0_6] : memref<64x16xf32, #tpu.memory_space<vmem>>, vector<64x16xf32>
    %cst = arith.constant dense<0.000000e+00> : vector<64x256xf32>
    %6 = tpu.matmul %5, %0, %cst {dimension_numbers = #tpu.dot_dimension_numbers<[1], [0], [0], [1], [0, 0, 1, 1], [], []>} : vector<64x16xf32>, vector<16x256xf32>, vector<64x256xf32> -> vector<64x256xf32>
    %7 = vector.shape_cast %3 : vector<1x256xf32> to vector<1x256xf32>
    %8 = vector.broadcast %7 : vector<1x256xf32> to vector<64x256xf32>
    %9 = arith.addf %6, %8 : vector<64x256xf32>
    %10 = vector.shape_cast %4 : vector<1x256xf32> to vector<1x256xf32>
    %11 = vector.broadcast %10 : vector<1x256xf32> to vector<8x256xf32>
    %cst_7 = arith.constant 0.000000e+00 : f32
    %12 = vector.broadcast %cst_7 : f32 to vector<8x64xf32>
    %13 = vector.extract_strided_slice %9 {offsets = [0, 0], sizes = [8, 256], strides = [1, 1]} : vector<64x256xf32> to vector<8x256xf32>
    %cst_8 = arith.constant dense<0.000000e+00> : vector<8x256xf32>
    %14 = tpu.matmul %12, %1, %cst_8 {dimension_numbers = #tpu.dot_dimension_numbers<[1], [0], [0], [1], [0, 0, 1, 1], [], []>} : vector<8x64xf32>, vector<64x256xf32>, vector<8x256xf32> -> vector<8x256xf32>
    %15 = arith.addf %13, %14 : vector<8x256xf32>
    %16 = arith.negf %15 : vector<8x256xf32>
    %17 = math.exp %16 : vector<8x256xf32>
    %cst_9 = arith.constant 1.000000e+00 : f32
    %18 = vector.broadcast %cst_9 : f32 to vector<8x256xf32>
    %19 = arith.addf %18, %17 : vector<8x256xf32>
    %20 = arith.divf %18, %19 : vector<8x256xf32>
    %21 = vector.extract_strided_slice %20 {offsets = [0, 0], sizes = [8, 64], strides = [1, 1]} : vector<8x256xf32> to vector<8x64xf32>
    %22 = vector.extract_strided_slice %20 {offsets = [0, 64], sizes = [8, 64], strides = [1, 1]} : vector<8x256xf32> to vector<8x64xf32>
    %23 = vector.extract_strided_slice %20 {offsets = [0, 128], sizes = [8, 64], strides = [1, 1]} : vector<8x256xf32> to vector<8x64xf32>
    %cst_10 = arith.constant 2.000000e+00 : f32
    %24 = vector.broadcast %cst_10 : f32 to vector<8x64xf32>
    %25 = arith.mulf %24, %23 : vector<8x64xf32>
    %cst_11 = arith.constant 1.000000e+00 : f32
    %26 = vector.broadcast %cst_11 : f32 to vector<8x64xf32>
    %27 = arith.subf %25, %26 : vector<8x64xf32>
    %28 = vector.extract_strided_slice %20 {offsets = [0, 192], sizes = [8, 64], strides = [1, 1]} : vector<8x256xf32> to vector<8x64xf32>
    %29 = arith.mulf %22, %12 : vector<8x64xf32>
    %30 = arith.mulf %21, %27 : vector<8x64xf32>
    %31 = arith.addf %29, %30 : vector<8x64xf32>
    %32 = math.tanh %31 : vector<8x64xf32>
    %33 = arith.mulf %28, %32 : vector<8x64xf32>
    %34 = tpu.concatenate %33, %12 in 1 : vector<8x64xf32>, vector<8x64xf32> -> vector<8x128xf32>
    %cst_12 = arith.constant dense<0.000000e+00> : vector<8x256xf32>
    %35 = tpu.matmul %34, %2, %cst_12 {dimension_numbers = #tpu.dot_dimension_numbers<[1], [0], [0], [1], [0, 0, 1, 1], [], []>} : vector<8x128xf32>, vector<128x256xf32>, vector<8x256xf32> -> vector<8x256xf32>
    %36 = arith.addf %35, %11 : vector<8x256xf32>
    %37 = arith.negf %36 : vector<8x256xf32>
    %38 = math.exp %37 : vector<8x256xf32>
    %cst_13 = arith.constant 1.000000e+00 : f32
    %39 = vector.broadcast %cst_13 : f32 to vector<8x256xf32>
    %40 = arith.addf %39, %38 : vector<8x256xf32>
    %41 = arith.divf %39, %40 : vector<8x256xf32>
    %42 = vector.extract_strided_slice %41 {offsets = [0, 0], sizes = [8, 64], strides = [1, 1]} : vector<8x256xf32> to vector<8x64xf32>
    %43 = vector.extract_strided_slice %41 {offsets = [0, 64], sizes = [8, 64], strides = [1, 1]} : vector<8x256xf32> to vector<8x64xf32>
    %44 = vector.extract_strided_slice %41 {offsets = [0, 128], sizes = [8, 64], strides = [1, 1]} : vector<8x256xf32> to vector<8x64xf32>
    %cst_14 = arith.constant 2.000000e+00 : f32
    %45 = vector.broadcast %cst_14 : f32 to vector<8x64xf32>
    %46 = arith.mulf %45, %44 : vector<8x64xf32>
    %cst_15 = arith.constant 1.000000e+00 : f32
    %47 = vector.broadcast %cst_15 : f32 to vector<8x64xf32>
    %48 = arith.subf %46, %47 : vector<8x64xf32>
    %49 = vector.extract_strided_slice %41 {offsets = [0, 192], sizes = [8, 64], strides = [1, 1]} : vector<8x256xf32> to vector<8x64xf32>
    %50 = arith.mulf %43, %12 : vector<8x64xf32>
    %51 = arith.mulf %42, %48 : vector<8x64xf32>
    %52 = arith.addf %50, %51 : vector<8x64xf32>
    %53 = math.tanh %52 : vector<8x64xf32>
    %54 = arith.mulf %49, %53 : vector<8x64xf32>
    %55 = vector.extract_strided_slice %9 {offsets = [8, 0], sizes = [8, 256], strides = [1, 1]} : vector<64x256xf32> to vector<8x256xf32>
    %cst_16 = arith.constant dense<0.000000e+00> : vector<8x256xf32>
    %56 = tpu.matmul %33, %1, %cst_16 {dimension_numbers = #tpu.dot_dimension_numbers<[1], [0], [0], [1], [0, 0, 1, 1], [], []>} : vector<8x64xf32>, vector<64x256xf32>, vector<8x256xf32> -> vector<8x256xf32>
    %57 = arith.addf %55, %56 : vector<8x256xf32>
    %58 = arith.negf %57 : vector<8x256xf32>
    %59 = math.exp %58 : vector<8x256xf32>
    %cst_17 = arith.constant 1.000000e+00 : f32
    %60 = vector.broadcast %cst_17 : f32 to vector<8x256xf32>
    %61 = arith.addf %60, %59 : vector<8x256xf32>
    %62 = arith.divf %60, %61 : vector<8x256xf32>
    %63 = vector.extract_strided_slice %62 {offsets = [0, 0], sizes = [8, 64], strides = [1, 1]} : vector<8x256xf32> to vector<8x64xf32>
    %64 = vector.extract_strided_slice %62 {offsets = [0, 64], sizes = [8, 64], strides = [1, 1]} : vector<8x256xf32> to vector<8x64xf32>
    %65 = vector.extract_strided_slice %62 {offsets = [0, 128], sizes = [8, 64], strides = [1, 1]} : vector<8x256xf32> to vector<8x64xf32>
    %cst_18 = arith.constant 2.000000e+00 : f32
    %66 = vector.broadcast %cst_18 : f32 to vector<8x64xf32>
    %67 = arith.mulf %66, %65 : vector<8x64xf32>
    %cst_19 = arith.constant 1.000000e+00 : f32
    %68 = vector.broadcast %cst_19 : f32 to vector<8x64xf32>
    %69 = arith.subf %67, %68 : vector<8x64xf32>
    %70 = vector.extract_strided_slice %62 {offsets = [0, 192], sizes = [8, 64], strides = [1, 1]} : vector<8x256xf32> to vector<8x64xf32>
    %71 = arith.mulf %64, %31 : vector<8x64xf32>
    %72 = arith.mulf %63, %69 : vector<8x64xf32>
    %73 = arith.addf %71, %72 : vector<8x64xf32>
    %74 = math.tanh %73 : vector<8x64xf32>
    %75 = arith.mulf %70, %74 : vector<8x64xf32>
    %76 = tpu.concatenate %75, %54 in 1 : vector<8x64xf32>, vector<8x64xf32> -> vector<8x128xf32>
    %cst_20 = arith.constant dense<0.000000e+00> : vector<8x256xf32>
    %77 = tpu.matmul %76, %2, %cst_20 {dimension_numbers = #tpu.dot_dimension_numbers<[1], [0], [0], [1], [0, 0, 1, 1], [], []>} : vector<8x128xf32>, vector<128x256xf32>, vector<8x256xf32> -> vector<8x256xf32>
    %78 = arith.addf %77, %11 : vector<8x256xf32>
    %79 = arith.negf %78 : vector<8x256xf32>
    %80 = math.exp %79 : vector<8x256xf32>
    %cst_21 = arith.constant 1.000000e+00 : f32
    %81 = vector.broadcast %cst_21 : f32 to vector<8x256xf32>
    %82 = arith.addf %81, %80 : vector<8x256xf32>
    %83 = arith.divf %81, %82 : vector<8x256xf32>
    %84 = vector.extract_strided_slice %83 {offsets = [0, 0], sizes = [8, 64], strides = [1, 1]} : vector<8x256xf32> to vector<8x64xf32>
    %85 = vector.extract_strided_slice %83 {offsets = [0, 64], sizes = [8, 64], strides = [1, 1]} : vector<8x256xf32> to vector<8x64xf32>
    %86 = vector.extract_strided_slice %83 {offsets = [0, 128], sizes = [8, 64], strides = [1, 1]} : vector<8x256xf32> to vector<8x64xf32>
    %cst_22 = arith.constant 2.000000e+00 : f32
    %87 = vector.broadcast %cst_22 : f32 to vector<8x64xf32>
    %88 = arith.mulf %87, %86 : vector<8x64xf32>
    %cst_23 = arith.constant 1.000000e+00 : f32
    %89 = vector.broadcast %cst_23 : f32 to vector<8x64xf32>
    %90 = arith.subf %88, %89 : vector<8x64xf32>
    %91 = vector.extract_strided_slice %83 {offsets = [0, 192], sizes = [8, 64], strides = [1, 1]} : vector<8x256xf32> to vector<8x64xf32>
    %92 = arith.mulf %85, %52 : vector<8x64xf32>
    %93 = arith.mulf %84, %90 : vector<8x64xf32>
    %94 = arith.addf %92, %93 : vector<8x64xf32>
    %95 = math.tanh %94 : vector<8x64xf32>
    %96 = arith.mulf %91, %95 : vector<8x64xf32>
    %97 = vector.extract_strided_slice %9 {offsets = [16, 0], sizes = [8, 256], strides = [1, 1]} : vector<64x256xf32> to vector<8x256xf32>
    %cst_24 = arith.constant dense<0.000000e+00> : vector<8x256xf32>
    %98 = tpu.matmul %75, %1, %cst_24 {dimension_numbers = #tpu.dot_dimension_numbers<[1], [0], [0], [1], [0, 0, 1, 1], [], []>} : vector<8x64xf32>, vector<64x256xf32>, vector<8x256xf32> -> vector<8x256xf32>
    %99 = arith.addf %97, %98 : vector<8x256xf32>
    %100 = arith.negf %99 : vector<8x256xf32>
    %101 = math.exp %100 : vector<8x256xf32>
    %cst_25 = arith.constant 1.000000e+00 : f32
    %102 = vector.broadcast %cst_25 : f32 to vector<8x256xf32>
    %103 = arith.addf %102, %101 : vector<8x256xf32>
    %104 = arith.divf %102, %103 : vector<8x256xf32>
    %105 = vector.extract_strided_slice %104 {offsets = [0, 0], sizes = [8, 64], strides = [1, 1]} : vector<8x256xf32> to vector<8x64xf32>
    %106 = vector.extract_strided_slice %104 {offsets = [0, 64], sizes = [8, 64], strides = [1, 1]} : vector<8x256xf32> to vector<8x64xf32>
    %107 = vector.extract_strided_slice %104 {offsets = [0, 128], sizes = [8, 64], strides = [1, 1]} : vector<8x256xf32> to vector<8x64xf32>
    %cst_26 = arith.constant 2.000000e+00 : f32
    %108 = vector.broadcast %cst_26 : f32 to vector<8x64xf32>
    %109 = arith.mulf %108, %107 : vector<8x64xf32>
    %cst_27 = arith.constant 1.000000e+00 : f32
    %110 = vector.broadcast %cst_27 : f32 to vector<8x64xf32>
    %111 = arith.subf %109, %110 : vector<8x64xf32>
    %112 = vector.extract_strided_slice %104 {offsets = [0, 192], sizes = [8, 64], strides = [1, 1]} : vector<8x256xf32> to vector<8x64xf32>
    %113 = arith.mulf %106, %73 : vector<8x64xf32>
    %114 = arith.mulf %105, %111 : vector<8x64xf32>
    %115 = arith.addf %113, %114 : vector<8x64xf32>
    %116 = math.tanh %115 : vector<8x64xf32>
    %117 = arith.mulf %112, %116 : vector<8x64xf32>
    %118 = tpu.concatenate %117, %96 in 1 : vector<8x64xf32>, vector<8x64xf32> -> vector<8x128xf32>
    %cst_28 = arith.constant dense<0.000000e+00> : vector<8x256xf32>
    %119 = tpu.matmul %118, %2, %cst_28 {dimension_numbers = #tpu.dot_dimension_numbers<[1], [0], [0], [1], [0, 0, 1, 1], [], []>} : vector<8x128xf32>, vector<128x256xf32>, vector<8x256xf32> -> vector<8x256xf32>
    %120 = arith.addf %119, %11 : vector<8x256xf32>
    %121 = arith.negf %120 : vector<8x256xf32>
    %122 = math.exp %121 : vector<8x256xf32>
    %cst_29 = arith.constant 1.000000e+00 : f32
    %123 = vector.broadcast %cst_29 : f32 to vector<8x256xf32>
    %124 = arith.addf %123, %122 : vector<8x256xf32>
    %125 = arith.divf %123, %124 : vector<8x256xf32>
    %126 = vector.extract_strided_slice %125 {offsets = [0, 0], sizes = [8, 64], strides = [1, 1]} : vector<8x256xf32> to vector<8x64xf32>
    %127 = vector.extract_strided_slice %125 {offsets = [0, 64], sizes = [8, 64], strides = [1, 1]} : vector<8x256xf32> to vector<8x64xf32>
    %128 = vector.extract_strided_slice %125 {offsets = [0, 128], sizes = [8, 64], strides = [1, 1]} : vector<8x256xf32> to vector<8x64xf32>
    %cst_30 = arith.constant 2.000000e+00 : f32
    %129 = vector.broadcast %cst_30 : f32 to vector<8x64xf32>
    %130 = arith.mulf %129, %128 : vector<8x64xf32>
    %cst_31 = arith.constant 1.000000e+00 : f32
    %131 = vector.broadcast %cst_31 : f32 to vector<8x64xf32>
    %132 = arith.subf %130, %131 : vector<8x64xf32>
    %133 = vector.extract_strided_slice %125 {offsets = [0, 192], sizes = [8, 64], strides = [1, 1]} : vector<8x256xf32> to vector<8x64xf32>
    %134 = arith.mulf %127, %94 : vector<8x64xf32>
    %135 = arith.mulf %126, %132 : vector<8x64xf32>
    %136 = arith.addf %134, %135 : vector<8x64xf32>
    %137 = math.tanh %136 : vector<8x64xf32>
    %138 = arith.mulf %133, %137 : vector<8x64xf32>
    %139 = vector.extract_strided_slice %9 {offsets = [24, 0], sizes = [8, 256], strides = [1, 1]} : vector<64x256xf32> to vector<8x256xf32>
    %cst_32 = arith.constant dense<0.000000e+00> : vector<8x256xf32>
    %140 = tpu.matmul %117, %1, %cst_32 {dimension_numbers = #tpu.dot_dimension_numbers<[1], [0], [0], [1], [0, 0, 1, 1], [], []>} : vector<8x64xf32>, vector<64x256xf32>, vector<8x256xf32> -> vector<8x256xf32>
    %141 = arith.addf %139, %140 : vector<8x256xf32>
    %142 = arith.negf %141 : vector<8x256xf32>
    %143 = math.exp %142 : vector<8x256xf32>
    %cst_33 = arith.constant 1.000000e+00 : f32
    %144 = vector.broadcast %cst_33 : f32 to vector<8x256xf32>
    %145 = arith.addf %144, %143 : vector<8x256xf32>
    %146 = arith.divf %144, %145 : vector<8x256xf32>
    %147 = vector.extract_strided_slice %146 {offsets = [0, 0], sizes = [8, 64], strides = [1, 1]} : vector<8x256xf32> to vector<8x64xf32>
    %148 = vector.extract_strided_slice %146 {offsets = [0, 64], sizes = [8, 64], strides = [1, 1]} : vector<8x256xf32> to vector<8x64xf32>
    %149 = vector.extract_strided_slice %146 {offsets = [0, 128], sizes = [8, 64], strides = [1, 1]} : vector<8x256xf32> to vector<8x64xf32>
    %cst_34 = arith.constant 2.000000e+00 : f32
    %150 = vector.broadcast %cst_34 : f32 to vector<8x64xf32>
    %151 = arith.mulf %150, %149 : vector<8x64xf32>
    %cst_35 = arith.constant 1.000000e+00 : f32
    %152 = vector.broadcast %cst_35 : f32 to vector<8x64xf32>
    %153 = arith.subf %151, %152 : vector<8x64xf32>
    %154 = vector.extract_strided_slice %146 {offsets = [0, 192], sizes = [8, 64], strides = [1, 1]} : vector<8x256xf32> to vector<8x64xf32>
    %155 = arith.mulf %148, %115 : vector<8x64xf32>
    %156 = arith.mulf %147, %153 : vector<8x64xf32>
    %157 = arith.addf %155, %156 : vector<8x64xf32>
    %158 = math.tanh %157 : vector<8x64xf32>
    %159 = arith.mulf %154, %158 : vector<8x64xf32>
    %160 = tpu.concatenate %159, %138 in 1 : vector<8x64xf32>, vector<8x64xf32> -> vector<8x128xf32>
    %cst_36 = arith.constant dense<0.000000e+00> : vector<8x256xf32>
    %161 = tpu.matmul %160, %2, %cst_36 {dimension_numbers = #tpu.dot_dimension_numbers<[1], [0], [0], [1], [0, 0, 1, 1], [], []>} : vector<8x128xf32>, vector<128x256xf32>, vector<8x256xf32> -> vector<8x256xf32>
    %162 = arith.addf %161, %11 : vector<8x256xf32>
    %163 = arith.negf %162 : vector<8x256xf32>
    %164 = math.exp %163 : vector<8x256xf32>
    %cst_37 = arith.constant 1.000000e+00 : f32
    %165 = vector.broadcast %cst_37 : f32 to vector<8x256xf32>
    %166 = arith.addf %165, %164 : vector<8x256xf32>
    %167 = arith.divf %165, %166 : vector<8x256xf32>
    %168 = vector.extract_strided_slice %167 {offsets = [0, 0], sizes = [8, 64], strides = [1, 1]} : vector<8x256xf32> to vector<8x64xf32>
    %169 = vector.extract_strided_slice %167 {offsets = [0, 64], sizes = [8, 64], strides = [1, 1]} : vector<8x256xf32> to vector<8x64xf32>
    %170 = vector.extract_strided_slice %167 {offsets = [0, 128], sizes = [8, 64], strides = [1, 1]} : vector<8x256xf32> to vector<8x64xf32>
    %cst_38 = arith.constant 2.000000e+00 : f32
    %171 = vector.broadcast %cst_38 : f32 to vector<8x64xf32>
    %172 = arith.mulf %171, %170 : vector<8x64xf32>
    %cst_39 = arith.constant 1.000000e+00 : f32
    %173 = vector.broadcast %cst_39 : f32 to vector<8x64xf32>
    %174 = arith.subf %172, %173 : vector<8x64xf32>
    %175 = vector.extract_strided_slice %167 {offsets = [0, 192], sizes = [8, 64], strides = [1, 1]} : vector<8x256xf32> to vector<8x64xf32>
    %176 = arith.mulf %169, %136 : vector<8x64xf32>
    %177 = arith.mulf %168, %174 : vector<8x64xf32>
    %178 = arith.addf %176, %177 : vector<8x64xf32>
    %179 = math.tanh %178 : vector<8x64xf32>
    %180 = arith.mulf %175, %179 : vector<8x64xf32>
    %181 = vector.extract_strided_slice %9 {offsets = [32, 0], sizes = [8, 256], strides = [1, 1]} : vector<64x256xf32> to vector<8x256xf32>
    %cst_40 = arith.constant dense<0.000000e+00> : vector<8x256xf32>
    %182 = tpu.matmul %159, %1, %cst_40 {dimension_numbers = #tpu.dot_dimension_numbers<[1], [0], [0], [1], [0, 0, 1, 1], [], []>} : vector<8x64xf32>, vector<64x256xf32>, vector<8x256xf32> -> vector<8x256xf32>
    %183 = arith.addf %181, %182 : vector<8x256xf32>
    %184 = arith.negf %183 : vector<8x256xf32>
    %185 = math.exp %184 : vector<8x256xf32>
    %cst_41 = arith.constant 1.000000e+00 : f32
    %186 = vector.broadcast %cst_41 : f32 to vector<8x256xf32>
    %187 = arith.addf %186, %185 : vector<8x256xf32>
    %188 = arith.divf %186, %187 : vector<8x256xf32>
    %189 = vector.extract_strided_slice %188 {offsets = [0, 0], sizes = [8, 64], strides = [1, 1]} : vector<8x256xf32> to vector<8x64xf32>
    %190 = vector.extract_strided_slice %188 {offsets = [0, 64], sizes = [8, 64], strides = [1, 1]} : vector<8x256xf32> to vector<8x64xf32>
    %191 = vector.extract_strided_slice %188 {offsets = [0, 128], sizes = [8, 64], strides = [1, 1]} : vector<8x256xf32> to vector<8x64xf32>
    %cst_42 = arith.constant 2.000000e+00 : f32
    %192 = vector.broadcast %cst_42 : f32 to vector<8x64xf32>
    %193 = arith.mulf %192, %191 : vector<8x64xf32>
    %cst_43 = arith.constant 1.000000e+00 : f32
    %194 = vector.broadcast %cst_43 : f32 to vector<8x64xf32>
    %195 = arith.subf %193, %194 : vector<8x64xf32>
    %196 = vector.extract_strided_slice %188 {offsets = [0, 192], sizes = [8, 64], strides = [1, 1]} : vector<8x256xf32> to vector<8x64xf32>
    %197 = arith.mulf %190, %157 : vector<8x64xf32>
    %198 = arith.mulf %189, %195 : vector<8x64xf32>
    %199 = arith.addf %197, %198 : vector<8x64xf32>
    %200 = math.tanh %199 : vector<8x64xf32>
    %201 = arith.mulf %196, %200 : vector<8x64xf32>
    %202 = tpu.concatenate %201, %180 in 1 : vector<8x64xf32>, vector<8x64xf32> -> vector<8x128xf32>
    %cst_44 = arith.constant dense<0.000000e+00> : vector<8x256xf32>
    %203 = tpu.matmul %202, %2, %cst_44 {dimension_numbers = #tpu.dot_dimension_numbers<[1], [0], [0], [1], [0, 0, 1, 1], [], []>} : vector<8x128xf32>, vector<128x256xf32>, vector<8x256xf32> -> vector<8x256xf32>
    %204 = arith.addf %203, %11 : vector<8x256xf32>
    %205 = arith.negf %204 : vector<8x256xf32>
    %206 = math.exp %205 : vector<8x256xf32>
    %cst_45 = arith.constant 1.000000e+00 : f32
    %207 = vector.broadcast %cst_45 : f32 to vector<8x256xf32>
    %208 = arith.addf %207, %206 : vector<8x256xf32>
    %209 = arith.divf %207, %208 : vector<8x256xf32>
    %210 = vector.extract_strided_slice %209 {offsets = [0, 0], sizes = [8, 64], strides = [1, 1]} : vector<8x256xf32> to vector<8x64xf32>
    %211 = vector.extract_strided_slice %209 {offsets = [0, 64], sizes = [8, 64], strides = [1, 1]} : vector<8x256xf32> to vector<8x64xf32>
    %212 = vector.extract_strided_slice %209 {offsets = [0, 128], sizes = [8, 64], strides = [1, 1]} : vector<8x256xf32> to vector<8x64xf32>
    %cst_46 = arith.constant 2.000000e+00 : f32
    %213 = vector.broadcast %cst_46 : f32 to vector<8x64xf32>
    %214 = arith.mulf %213, %212 : vector<8x64xf32>
    %cst_47 = arith.constant 1.000000e+00 : f32
    %215 = vector.broadcast %cst_47 : f32 to vector<8x64xf32>
    %216 = arith.subf %214, %215 : vector<8x64xf32>
    %217 = vector.extract_strided_slice %209 {offsets = [0, 192], sizes = [8, 64], strides = [1, 1]} : vector<8x256xf32> to vector<8x64xf32>
    %218 = arith.mulf %211, %178 : vector<8x64xf32>
    %219 = arith.mulf %210, %216 : vector<8x64xf32>
    %220 = arith.addf %218, %219 : vector<8x64xf32>
    %221 = math.tanh %220 : vector<8x64xf32>
    %222 = arith.mulf %217, %221 : vector<8x64xf32>
    %223 = vector.extract_strided_slice %9 {offsets = [40, 0], sizes = [8, 256], strides = [1, 1]} : vector<64x256xf32> to vector<8x256xf32>
    %cst_48 = arith.constant dense<0.000000e+00> : vector<8x256xf32>
    %224 = tpu.matmul %201, %1, %cst_48 {dimension_numbers = #tpu.dot_dimension_numbers<[1], [0], [0], [1], [0, 0, 1, 1], [], []>} : vector<8x64xf32>, vector<64x256xf32>, vector<8x256xf32> -> vector<8x256xf32>
    %225 = arith.addf %223, %224 : vector<8x256xf32>
    %226 = arith.negf %225 : vector<8x256xf32>
    %227 = math.exp %226 : vector<8x256xf32>
    %cst_49 = arith.constant 1.000000e+00 : f32
    %228 = vector.broadcast %cst_49 : f32 to vector<8x256xf32>
    %229 = arith.addf %228, %227 : vector<8x256xf32>
    %230 = arith.divf %228, %229 : vector<8x256xf32>
    %231 = vector.extract_strided_slice %230 {offsets = [0, 0], sizes = [8, 64], strides = [1, 1]} : vector<8x256xf32> to vector<8x64xf32>
    %232 = vector.extract_strided_slice %230 {offsets = [0, 64], sizes = [8, 64], strides = [1, 1]} : vector<8x256xf32> to vector<8x64xf32>
    %233 = vector.extract_strided_slice %230 {offsets = [0, 128], sizes = [8, 64], strides = [1, 1]} : vector<8x256xf32> to vector<8x64xf32>
    %cst_50 = arith.constant 2.000000e+00 : f32
    %234 = vector.broadcast %cst_50 : f32 to vector<8x64xf32>
    %235 = arith.mulf %234, %233 : vector<8x64xf32>
    %cst_51 = arith.constant 1.000000e+00 : f32
    %236 = vector.broadcast %cst_51 : f32 to vector<8x64xf32>
    %237 = arith.subf %235, %236 : vector<8x64xf32>
    %238 = vector.extract_strided_slice %230 {offsets = [0, 192], sizes = [8, 64], strides = [1, 1]} : vector<8x256xf32> to vector<8x64xf32>
    %239 = arith.mulf %232, %199 : vector<8x64xf32>
    %240 = arith.mulf %231, %237 : vector<8x64xf32>
    %241 = arith.addf %239, %240 : vector<8x64xf32>
    %242 = math.tanh %241 : vector<8x64xf32>
    %243 = arith.mulf %238, %242 : vector<8x64xf32>
    %244 = tpu.concatenate %243, %222 in 1 : vector<8x64xf32>, vector<8x64xf32> -> vector<8x128xf32>
    %cst_52 = arith.constant dense<0.000000e+00> : vector<8x256xf32>
    %245 = tpu.matmul %244, %2, %cst_52 {dimension_numbers = #tpu.dot_dimension_numbers<[1], [0], [0], [1], [0, 0, 1, 1], [], []>} : vector<8x128xf32>, vector<128x256xf32>, vector<8x256xf32> -> vector<8x256xf32>
    %246 = arith.addf %245, %11 : vector<8x256xf32>
    %247 = arith.negf %246 : vector<8x256xf32>
    %248 = math.exp %247 : vector<8x256xf32>
    %cst_53 = arith.constant 1.000000e+00 : f32
    %249 = vector.broadcast %cst_53 : f32 to vector<8x256xf32>
    %250 = arith.addf %249, %248 : vector<8x256xf32>
    %251 = arith.divf %249, %250 : vector<8x256xf32>
    %252 = vector.extract_strided_slice %251 {offsets = [0, 0], sizes = [8, 64], strides = [1, 1]} : vector<8x256xf32> to vector<8x64xf32>
    %253 = vector.extract_strided_slice %251 {offsets = [0, 64], sizes = [8, 64], strides = [1, 1]} : vector<8x256xf32> to vector<8x64xf32>
    %254 = vector.extract_strided_slice %251 {offsets = [0, 128], sizes = [8, 64], strides = [1, 1]} : vector<8x256xf32> to vector<8x64xf32>
    %cst_54 = arith.constant 2.000000e+00 : f32
    %255 = vector.broadcast %cst_54 : f32 to vector<8x64xf32>
    %256 = arith.mulf %255, %254 : vector<8x64xf32>
    %cst_55 = arith.constant 1.000000e+00 : f32
    %257 = vector.broadcast %cst_55 : f32 to vector<8x64xf32>
    %258 = arith.subf %256, %257 : vector<8x64xf32>
    %259 = vector.extract_strided_slice %251 {offsets = [0, 192], sizes = [8, 64], strides = [1, 1]} : vector<8x256xf32> to vector<8x64xf32>
    %260 = arith.mulf %253, %220 : vector<8x64xf32>
    %261 = arith.mulf %252, %258 : vector<8x64xf32>
    %262 = arith.addf %260, %261 : vector<8x64xf32>
    %263 = math.tanh %262 : vector<8x64xf32>
    %264 = arith.mulf %259, %263 : vector<8x64xf32>
    %265 = vector.extract_strided_slice %9 {offsets = [48, 0], sizes = [8, 256], strides = [1, 1]} : vector<64x256xf32> to vector<8x256xf32>
    %cst_56 = arith.constant dense<0.000000e+00> : vector<8x256xf32>
    %266 = tpu.matmul %243, %1, %cst_56 {dimension_numbers = #tpu.dot_dimension_numbers<[1], [0], [0], [1], [0, 0, 1, 1], [], []>} : vector<8x64xf32>, vector<64x256xf32>, vector<8x256xf32> -> vector<8x256xf32>
    %267 = arith.addf %265, %266 : vector<8x256xf32>
    %268 = arith.negf %267 : vector<8x256xf32>
    %269 = math.exp %268 : vector<8x256xf32>
    %cst_57 = arith.constant 1.000000e+00 : f32
    %270 = vector.broadcast %cst_57 : f32 to vector<8x256xf32>
    %271 = arith.addf %270, %269 : vector<8x256xf32>
    %272 = arith.divf %270, %271 : vector<8x256xf32>
    %273 = vector.extract_strided_slice %272 {offsets = [0, 0], sizes = [8, 64], strides = [1, 1]} : vector<8x256xf32> to vector<8x64xf32>
    %274 = vector.extract_strided_slice %272 {offsets = [0, 64], sizes = [8, 64], strides = [1, 1]} : vector<8x256xf32> to vector<8x64xf32>
    %275 = vector.extract_strided_slice %272 {offsets = [0, 128], sizes = [8, 64], strides = [1, 1]} : vector<8x256xf32> to vector<8x64xf32>
    %cst_58 = arith.constant 2.000000e+00 : f32
    %276 = vector.broadcast %cst_58 : f32 to vector<8x64xf32>
    %277 = arith.mulf %276, %275 : vector<8x64xf32>
    %cst_59 = arith.constant 1.000000e+00 : f32
    %278 = vector.broadcast %cst_59 : f32 to vector<8x64xf32>
    %279 = arith.subf %277, %278 : vector<8x64xf32>
    %280 = vector.extract_strided_slice %272 {offsets = [0, 192], sizes = [8, 64], strides = [1, 1]} : vector<8x256xf32> to vector<8x64xf32>
    %281 = arith.mulf %274, %241 : vector<8x64xf32>
    %282 = arith.mulf %273, %279 : vector<8x64xf32>
    %283 = arith.addf %281, %282 : vector<8x64xf32>
    %284 = math.tanh %283 : vector<8x64xf32>
    %285 = arith.mulf %280, %284 : vector<8x64xf32>
    %286 = tpu.concatenate %285, %264 in 1 : vector<8x64xf32>, vector<8x64xf32> -> vector<8x128xf32>
    %cst_60 = arith.constant dense<0.000000e+00> : vector<8x256xf32>
    %287 = tpu.matmul %286, %2, %cst_60 {dimension_numbers = #tpu.dot_dimension_numbers<[1], [0], [0], [1], [0, 0, 1, 1], [], []>} : vector<8x128xf32>, vector<128x256xf32>, vector<8x256xf32> -> vector<8x256xf32>
    %288 = arith.addf %287, %11 : vector<8x256xf32>
    %289 = arith.negf %288 : vector<8x256xf32>
    %290 = math.exp %289 : vector<8x256xf32>
    %cst_61 = arith.constant 1.000000e+00 : f32
    %291 = vector.broadcast %cst_61 : f32 to vector<8x256xf32>
    %292 = arith.addf %291, %290 : vector<8x256xf32>
    %293 = arith.divf %291, %292 : vector<8x256xf32>
    %294 = vector.extract_strided_slice %293 {offsets = [0, 0], sizes = [8, 64], strides = [1, 1]} : vector<8x256xf32> to vector<8x64xf32>
    %295 = vector.extract_strided_slice %293 {offsets = [0, 64], sizes = [8, 64], strides = [1, 1]} : vector<8x256xf32> to vector<8x64xf32>
    %296 = vector.extract_strided_slice %293 {offsets = [0, 128], sizes = [8, 64], strides = [1, 1]} : vector<8x256xf32> to vector<8x64xf32>
    %cst_62 = arith.constant 2.000000e+00 : f32
    %297 = vector.broadcast %cst_62 : f32 to vector<8x64xf32>
    %298 = arith.mulf %297, %296 : vector<8x64xf32>
    %cst_63 = arith.constant 1.000000e+00 : f32
    %299 = vector.broadcast %cst_63 : f32 to vector<8x64xf32>
    %300 = arith.subf %298, %299 : vector<8x64xf32>
    %301 = vector.extract_strided_slice %293 {offsets = [0, 192], sizes = [8, 64], strides = [1, 1]} : vector<8x256xf32> to vector<8x64xf32>
    %302 = arith.mulf %295, %262 : vector<8x64xf32>
    %303 = arith.mulf %294, %300 : vector<8x64xf32>
    %304 = arith.addf %302, %303 : vector<8x64xf32>
    %305 = math.tanh %304 : vector<8x64xf32>
    %306 = arith.mulf %301, %305 : vector<8x64xf32>
    %307 = vector.extract_strided_slice %9 {offsets = [56, 0], sizes = [8, 256], strides = [1, 1]} : vector<64x256xf32> to vector<8x256xf32>
    %cst_64 = arith.constant dense<0.000000e+00> : vector<8x256xf32>
    %308 = tpu.matmul %285, %1, %cst_64 {dimension_numbers = #tpu.dot_dimension_numbers<[1], [0], [0], [1], [0, 0, 1, 1], [], []>} : vector<8x64xf32>, vector<64x256xf32>, vector<8x256xf32> -> vector<8x256xf32>
    %309 = arith.addf %307, %308 : vector<8x256xf32>
    %310 = arith.negf %309 : vector<8x256xf32>
    %311 = math.exp %310 : vector<8x256xf32>
    %cst_65 = arith.constant 1.000000e+00 : f32
    %312 = vector.broadcast %cst_65 : f32 to vector<8x256xf32>
    %313 = arith.addf %312, %311 : vector<8x256xf32>
    %314 = arith.divf %312, %313 : vector<8x256xf32>
    %315 = vector.extract_strided_slice %314 {offsets = [0, 0], sizes = [8, 64], strides = [1, 1]} : vector<8x256xf32> to vector<8x64xf32>
    %316 = vector.extract_strided_slice %314 {offsets = [0, 64], sizes = [8, 64], strides = [1, 1]} : vector<8x256xf32> to vector<8x64xf32>
    %317 = vector.extract_strided_slice %314 {offsets = [0, 128], sizes = [8, 64], strides = [1, 1]} : vector<8x256xf32> to vector<8x64xf32>
    %cst_66 = arith.constant 2.000000e+00 : f32
    %318 = vector.broadcast %cst_66 : f32 to vector<8x64xf32>
    %319 = arith.mulf %318, %317 : vector<8x64xf32>
    %cst_67 = arith.constant 1.000000e+00 : f32
    %320 = vector.broadcast %cst_67 : f32 to vector<8x64xf32>
    %321 = arith.subf %319, %320 : vector<8x64xf32>
    %322 = vector.extract_strided_slice %314 {offsets = [0, 192], sizes = [8, 64], strides = [1, 1]} : vector<8x256xf32> to vector<8x64xf32>
    %323 = arith.mulf %316, %283 : vector<8x64xf32>
    %324 = arith.mulf %315, %321 : vector<8x64xf32>
    %325 = arith.addf %323, %324 : vector<8x64xf32>
    %326 = math.tanh %325 : vector<8x64xf32>
    %327 = arith.mulf %322, %326 : vector<8x64xf32>
    %328 = tpu.concatenate %327, %306 in 1 : vector<8x64xf32>, vector<8x64xf32> -> vector<8x128xf32>
    %cst_68 = arith.constant dense<0.000000e+00> : vector<8x256xf32>
    %329 = tpu.matmul %328, %2, %cst_68 {dimension_numbers = #tpu.dot_dimension_numbers<[1], [0], [0], [1], [0, 0, 1, 1], [], []>} : vector<8x128xf32>, vector<128x256xf32>, vector<8x256xf32> -> vector<8x256xf32>
    %330 = arith.addf %329, %11 : vector<8x256xf32>
    %331 = arith.negf %330 : vector<8x256xf32>
    %332 = math.exp %331 : vector<8x256xf32>
    %cst_69 = arith.constant 1.000000e+00 : f32
    %333 = vector.broadcast %cst_69 : f32 to vector<8x256xf32>
    %334 = arith.addf %333, %332 : vector<8x256xf32>
    %335 = arith.divf %333, %334 : vector<8x256xf32>
    %336 = vector.extract_strided_slice %335 {offsets = [0, 0], sizes = [8, 64], strides = [1, 1]} : vector<8x256xf32> to vector<8x64xf32>
    %337 = vector.extract_strided_slice %335 {offsets = [0, 64], sizes = [8, 64], strides = [1, 1]} : vector<8x256xf32> to vector<8x64xf32>
    %338 = vector.extract_strided_slice %335 {offsets = [0, 128], sizes = [8, 64], strides = [1, 1]} : vector<8x256xf32> to vector<8x64xf32>
    %cst_70 = arith.constant 2.000000e+00 : f32
    %339 = vector.broadcast %cst_70 : f32 to vector<8x64xf32>
    %340 = arith.mulf %339, %338 : vector<8x64xf32>
    %cst_71 = arith.constant 1.000000e+00 : f32
    %341 = vector.broadcast %cst_71 : f32 to vector<8x64xf32>
    %342 = arith.subf %340, %341 : vector<8x64xf32>
    %343 = vector.extract_strided_slice %335 {offsets = [0, 192], sizes = [8, 64], strides = [1, 1]} : vector<8x256xf32> to vector<8x64xf32>
    %344 = arith.mulf %337, %304 : vector<8x64xf32>
    %345 = arith.mulf %336, %342 : vector<8x64xf32>
    %346 = arith.addf %344, %345 : vector<8x64xf32>
    %347 = math.tanh %346 : vector<8x64xf32>
    %348 = arith.mulf %343, %347 : vector<8x64xf32>
    %c0_72 = arith.constant 0 : index
    %c0_73 = arith.constant 0 : index
    %349 = vector.load %arg3[%c0_72, %c0_73] : memref<73x2xf32, #tpu.memory_space<vmem>>, vector<64x2xf32>
    %c64 = arith.constant 64 : index
    %c0_74 = arith.constant 0 : index
    %350 = vector.load %arg3[%c64, %c0_74] : memref<73x2xf32, #tpu.memory_space<vmem>>, vector<8x2xf32>
    %c72 = arith.constant 72 : index
    %c0_75 = arith.constant 0 : index
    %351 = vector.load %arg3[%c72, %c0_75] : memref<73x2xf32, #tpu.memory_space<vmem>>, vector<1x2xf32>
    %cst_76 = arith.constant dense<0.000000e+00> : vector<8x2xf32>
    %352 = tpu.matmul %348, %349, %cst_76 {dimension_numbers = #tpu.dot_dimension_numbers<[1], [0], [0], [1], [0, 0, 1, 1], [], []>} : vector<8x64xf32>, vector<64x2xf32>, vector<8x2xf32> -> vector<8x2xf32>
    %c0_77 = arith.constant 0 : index
    %c0_78 = arith.constant 0 : index
    %353 = vector.load %arg1[%c0_77, %c0_78] : memref<8x8xf32, #tpu.memory_space<vmem>>, vector<8x8xf32>
    %cst_79 = arith.constant dense<0.000000e+00> : vector<8x2xf32>
    %354 = tpu.matmul %353, %350, %cst_79 {dimension_numbers = #tpu.dot_dimension_numbers<[1], [0], [0], [1], [0, 0, 1, 1], [], []>} : vector<8x8xf32>, vector<8x2xf32>, vector<8x2xf32> -> vector<8x2xf32>
    %355 = arith.addf %352, %354 : vector<8x2xf32>
    %356 = vector.broadcast %351 : vector<1x2xf32> to vector<8x2xf32>
    %357 = arith.addf %355, %356 : vector<8x2xf32>
    %358 = tpu.iota {dimensions = array<i32: 1>} : vector<8x2xi32>
    %c0_i32 = arith.constant 0 : i32
    %359 = vector.broadcast %c0_i32 : i32 to vector<8x2xi32>
    %360 = arith.cmpi eq, %358, %359 : vector<8x2xi32>
    %cst_80 = arith.constant 0.000000e+00 : f32
    %361 = vector.broadcast %cst_80 : f32 to vector<8x2xf32>
    %362 = arith.maximumf %357, %361 : vector<8x2xf32>
    %363 = vector.broadcast %cst_80 : f32 to vector<8x2xf32>
    %364 = arith.subf %357, %363 : vector<8x2xf32>
    %365 = arith.cmpf one, %364, %364 : vector<8x2xf32>
    %366 = vector.broadcast %cst_80 : f32 to vector<8x2xf32>
    %367 = arith.addf %357, %366 : vector<8x2xf32>
    %368 = math.absf %364 : vector<8x2xf32>
    %cst_81 = arith.constant 0.000000e+00 : f32
    %369 = vector.broadcast %cst_81 : f32 to vector<8x2xf32>
    %370 = arith.subf %369, %368 : vector<8x2xf32>
    %371 = math.exp %370 : vector<8x2xf32>
    %372 = math.log1p %371 : vector<8x2xf32>
    %373 = arith.addf %362, %372 : vector<8x2xf32>
    %374 = arith.select %365, %367, %373 : vector<8x2xi1>, vector<8x2xf32>
    %cst_82 = arith.constant 9.99999997E-7 : f32
    %375 = vector.broadcast %cst_82 : f32 to vector<8x2xf32>
    %376 = arith.addf %374, %375 : vector<8x2xf32>
    %377 = arith.select %360, %357, %376 : vector<8x2xi1>, vector<8x2xf32>
    %c0_83 = arith.constant 0 : index
    %c0_84 = arith.constant 0 : index
    %378 = vector.load %arg4[%c0_83, %c0_84] : memref<8x2xf32, #tpu.memory_space<vmem>>, vector<8x2xf32>
    tpu.vector_store %arg4[%c0_83, %c0_84], %377 {strides = array<i32>} : memref<8x2xf32, #tpu.memory_space<vmem>>, vector<8x2xf32>,
    return
  }
}

</mosaic_0001>

<llo_original>
// kernel: lstm_model_forward.1
$region0: #{lstm_model_forward.1}
  #allocation0 [shape = 'u32[]', space=smem, size = 0x4, offset = 0x4, fixed_abs, tag = 'smem constant byte address 0x4 - core index']
  #allocation1 [shape = 'u32[144,128]{1,0:T(1,128)}', space=vmem, size = 0x12000, scoped, tag = 'internal scratch']
  %s0 = inlined_call_operand.vmem [shape: f32[64,16], index: 0, kind: input, shape index: {}]
  %s1 = inlined_call_operand.vmem [shape: f32[8,8], index: 1, kind: input, shape index: {}]
  %s2 = inlined_call_operand.hbm [shape: f32[210,256], index: 2, kind: input, shape index: {}]
  %s3 = inlined_call_operand.vmem [shape: f32[73,2], index: 3, kind: input, shape index: {}]
  %s4 = inlined_call_operand.vmem [shape: f32[8,2], index: 4, kind: output, shape index: {}]
  %s5 = sld [smem:[#allocation0]]
  $region30: #{lstm_model_forward.1} parent=0
    _
  %s7 = ssub.s32 1, %s5
  %s8 = scalar_select 0, %s7, %s5
  $region1: #{lstm_model_forward.1} parent=0
    #allocation2 [shape = 'u8[221184]{0}', space=vmem, size = 0x36000, scoped, tag = 'input window, operand 2, single buffered']
    #allocation3 [shape = 's32[1]{0}', space=sflag, size = 0x4, scoped, tag = 'scoped memory for lstm_model_forward.1']
    %9 = vsyncpa [#allocation3], 0
    // Predicated region
    $region2: #{lstm_model_forward.1} parent=1 // pred_check
      _
    $region3: #{lstm_model_forward.1} parent=1 // pred_check_branch
      %11 = sbr.rel (0) target = $region5
    $region4: #{lstm_model_forward.1} parent=1 // pred_region
      _
    $region5: #{lstm_model_forward.1} parent=1 // pred_fallthru
      _
    // Predicated region
    $region6: #{lstm_model_forward.1} parent=1 // pred_check
      _
    $region7: #{lstm_model_forward.1} parent=1 // pred_check_branch
      %13 = sbr.rel (0) target = $region9
    $region8: #{lstm_model_forward.1} parent=1 // pred_region
      _
    $region9: #{lstm_model_forward.1} parent=1 // pred_fallthru
      _
    // Predicated region
    $region10: #{lstm_model_forward.1} parent=1 // pred_check
      _
    $region11: #{lstm_model_forward.1} parent=1 // pred_check_branch
      %15 = sbr.rel (0) target = $region13
    $region12: #{lstm_model_forward.1} parent=1 // pred_region
      %s17 = ssub.s32 6912, 6912
      %18 = vsyncadd [#allocation3], %s17
      %s19 = sshll.u32 [#allocation2], 4
      %s20 = int_to_ptr.vmem [resolvable:$true] %s19
      %25 = dma.hbm_to_vmem [thread:$0]  %s2, 6912, %s20, [#allocation3], 256, 256, 16
    $region13: #{lstm_model_forward.1} parent=1 // pred_fallthru
      _
    // Predicated region
    $region14: #{lstm_model_forward.1} parent=1 // pred_check
      _
    $region15: #{lstm_model_forward.1} parent=1 // pred_check_branch
      %27 = sbr.rel (0) target = $region17
    $region16: #{lstm_model_forward.1} parent=1 // pred_region
      _
    $region17: #{lstm_model_forward.1} parent=1 // pred_fallthru
      _
    // Predicated region
    $region18: #{lstm_model_forward.1} parent=1 // pred_check
      _
    $region19: #{lstm_model_forward.1} parent=1 // pred_check_branch
      %29 = sbr.rel (0) target = $region21
    $region20: #{lstm_model_forward.1} parent=1 // pred_region
      %30 = dma.done [#allocation3], 6912
    $region21: #{lstm_model_forward.1} parent=1 // pred_fallthru
      _
    %v31 = vld [vmem:[#allocation2] sm:$0xff]
    %v32 = vld [vmem:[#allocation2 + $0x8] sm:$0xff]
    %v33 = vld [vmem:[#allocation2 + $0x10] sm:$0xff]
    %v34 = vld [vmem:[#allocation2 + $0x18] sm:$0xff]
    %v35 = vld [vmem:[#allocation2 + $0x20] sm:$0xff]
    %v36 = vld [vmem:[#allocation2 + $0x28] sm:$0xff]
    %v37 = vld [vmem:[#allocation2 + $0x30] sm:$0xff]
    %v38 = vld [vmem:[#allocation2 + $0x38] sm:$0xff]
    %v39 = vld [vmem:[#allocation2 + $0x40] sm:$0xff]
    %v40 = vld [vmem:[#allocation2 + $0x48] sm:$0xff]
    %v41 = vld [vmem:[#allocation2 + $0x50] sm:$0xff]
    %v42 = vld [vmem:[#allocation2 + $0x58] sm:$0xff]
    %v43 = vld [vmem:[#allocation2 + $0x60] sm:$0xff]
    %v44 = vld [vmem:[#allocation2 + $0x68] sm:$0xff]
    %v45 = vld [vmem:[#allocation2 + $0x70] sm:$0xff]
    %v46 = vld [vmem:[#allocation2 + $0x78] sm:$0xff]
    %v47 = vld [vmem:[#allocation2 + $0x80] sm:$0xff]
    %v48 = vld [vmem:[#allocation2 + $0x88] sm:$0xff]
    %v49 = vld [vmem:[#allocation2 + $0x90] sm:$0xff]
    %v50 = vld [vmem:[#allocation2 + $0x98] sm:$0xff]
    %v51 = vld [vmem:[#allocation2 + $0xa0] sm:$0xff]
    %v52 = vld [vmem:[#allocation2 + $0xa8] sm:$0xff]
    %v53 = vld [vmem:[#allocation2 + $0xb0] sm:$0xff]
    %v54 = vld [vmem:[#allocation2 + $0xb8] sm:$0xff]
    %v55 = vld [vmem:[#allocation2 + $0xc0] sm:$0xff]
    %v56 = vld [vmem:[#allocation2 + $0xc8] sm:$0xff]
    %v57 = vld [vmem:[#allocation2 + $0xd0] sm:$0xff]
    %v58 = vld [vmem:[#allocation2 + $0xd8] sm:$0xff]
    %v59 = vld [vmem:[#allocation2 + $0xe0] sm:$0xff]
    %v60 = vld [vmem:[#allocation2 + $0xe8] sm:$0xff]
    %v61 = vld [vmem:[#allocation2 + $0xf0] sm:$0xff]
    %v62 = vld [vmem:[#allocation2 + $0xf8] sm:$0xff]
    %v63 = vld [vmem:[#allocation2 + $0x100] sm:$0xff]
    %v64 = vld [vmem:[#allocation2 + $0x108] sm:$0xff]
    %v65 = vld [vmem:[#allocation2 + $0x110] sm:$0xff]
    %v66 = vld [vmem:[#allocation2 + $0x118] sm:$0xff]
    %v67 = vld [vmem:[#allocation2 + $0x120] sm:$0xff]
    %v68 = vld [vmem:[#allocation2 + $0x128] sm:$0xff]
    %v69 = vld [vmem:[#allocation2 + $0x130] sm:$0xff]
    %v70 = vld [vmem:[#allocation2 + $0x138] sm:$0xff]
    %v71 = vld [vmem:[#allocation2 + $0x140] sm:$0xff]
    %v72 = vld [vmem:[#allocation2 + $0x148] sm:$0xff]
    %v73 = vld [vmem:[#allocation2 + $0x150] sm:$0xff]
    %v74 = vld [vmem:[#allocation2 + $0x158] sm:$0xff]
    %v75 = vld [vmem:[#allocation2 + $0x160] sm:$0xff]
    %v76 = vld [vmem:[#allocation2 + $0x168] sm:$0xff]
    %v77 = vld [vmem:[#allocation2 + $0x170] sm:$0xff]
    %v78 = vld [vmem:[#allocation2 + $0x178] sm:$0xff]
    %v79 = vld [vmem:[#allocation2 + $0x180] sm:$0xff]
    %v80 = vld [vmem:[#allocation2 + $0x188] sm:$0xff]
    %v81 = vld [vmem:[#allocation2 + $0x190] sm:$0xff]
    %v82 = vld [vmem:[#allocation2 + $0x198] sm:$0xff]
    %s83 = scalar_lea.vmem [#allocation2], 416
    %v84 = vld [vmem:[%s83] ss:$8 sm:$0x3]
    %s85 = scalar_lea.vmem [#allocation2], 417
    %v86 = vld [vmem:[%s85] ss:$8 sm:$0x3]
    %v87 = vld [vmem:[%s0] sm:$0xff]
    %v88 = vld [vmem:[%s0 + $0x8] sm:$0xff]
    %v89 = vld [vmem:[%s0 + $0x10] sm:$0xff]
    %v90 = vld [vmem:[%s0 + $0x18] sm:$0xff]
    %v91 = vld [vmem:[%s0 + $0x20] sm:$0xff]
    %v92 = vld [vmem:[%s0 + $0x28] sm:$0xff]
    %v93 = vld [vmem:[%s0 + $0x30] sm:$0xff]
    %v94 = vld [vmem:[%s0 + $0x38] sm:$0xff]
    %v96 = vlaneseq
    %v97 = vshrl.u32 %v96, 7
    %v98 = vsub.s32 0, %v97
    %v99 = vrot.slane %v84, %v98
    %v100 = vlaneseq
    %v101 = vshrl.u32 %v100, 7
    %v102 = vsub.s32 1, %v101
    %v103 = vrot.slane %v84, %v102
    %vm106 = vcmask 130048
    %v108 = vsel %vm106, %v87, 0
    %v111 = vsel %vm106, %v88, 0
    %v114 = vsel %vm106, %v89, 0
    %v117 = vsel %vm106, %v90, 0
    %v120 = vsel %vm106, %v91, 0
    %v123 = vsel %vm106, %v92, 0
    %v126 = vsel %vm106, %v93, 0
    %v129 = vsel %vm106, %v94, 0
    %131 = vmatprep.subr.mxu0 0.0
    %132 = vmatpush1.msra.mxu0 0.0
    %133 = vmatprep.subr.mxu0 0.0
    %134 = vmatpush1.msra.mxu0 0.0
    %135 = vmatprep.subr.mxu0 0.0
    %136 = vmatpush1.msra.mxu0 0.0
    %137 = vmatprep.subr.mxu0 0.0
    %138 = vmatpush1.msra.mxu0 0.0
    %139 = vmatprep.subr.mxu0 0.0
    %140 = vmatpush1.msra.mxu0 0.0
    %141 = vmatprep.subr.mxu0 0.0
    %142 = vmatpush1.msra.mxu0 0.0
    %143 = vmatprep.subr.mxu0 0.0
    %144 = vmatpush1.msra.mxu0 0.0
    %145 = vmatprep.subr.mxu0 0.0
    %146 = vmatpush1.msra.mxu0 0.0
    %147 = vmatprep.subr.mxu0 0.0
    %148 = vmatpush1.msra.mxu0 0.0
    %149 = vmatprep.subr.mxu0 0.0
    %150 = vmatpush1.msra.mxu0 0.0
    %151 = vmatprep.subr.mxu0 0.0
    %152 = vmatpush1.msra.mxu0 0.0
    %153 = vmatprep.subr.mxu0 0.0
    %154 = vmatpush1.msra.mxu0 0.0
    %155 = vmatprep.subr.mxu0 0.0
    %156 = vmatpush1.msra.mxu0 0.0
    %157 = vmatprep.subr.mxu0 0.0
    %158 = vmatpush1.msra.mxu0 0.0
    %159 = vmatprep.subr.mxu0 %v34
    %160 = vmatpush1.msra.mxu0 %v33
    %161 = vmatprep.subr.mxu0 %v32
    %162 = vmatpush1.msra.mxu0 %v31
    %163 = vmatprep.subr.mxu0 0.0
    %164 = vmatpush2.msra.mxu0 0.0
    %165 = vmatprep.subr.mxu0 0.0
    %166 = vmatpush2.msra.mxu0 0.0
    %167 = vmatprep.subr.mxu0 0.0
    %168 = vmatpush2.msra.mxu0 0.0
    %169 = vmatprep.subr.mxu0 0.0
    %170 = vmatpush2.msra.mxu0 0.0
    %171 = vmatprep.subr.mxu0 0.0
    %172 = vmatpush2.msra.mxu0 0.0
    %173 = vmatprep.subr.mxu0 0.0
    %174 = vmatpush2.msra.mxu0 0.0
    %175 = vmatprep.subr.mxu0 0.0
    %176 = vmatpush2.msra.mxu0 0.0
    %177 = vmatprep.subr.mxu0 0.0
    %178 = vmatpush2.msra.mxu0 0.0
    %179 = vmatprep.subr.mxu0 0.0
    %180 = vmatpush2.msra.mxu0 0.0
    %181 = vmatprep.subr.mxu0 0.0
    %182 = vmatpush2.msra.mxu0 0.0
    %183 = vmatprep.subr.mxu0 0.0
    %184 = vmatpush2.msra.mxu0 0.0
    %185 = vmatprep.subr.mxu0 0.0
    %186 = vmatpush2.msra.mxu0 0.0
    %187 = vmatprep.subr.mxu0 0.0
    %188 = vmatpush2.msra.mxu0 0.0
    %189 = vmatprep.subr.mxu0 0.0
    %190 = vmatpush2.msra.mxu0 0.0
    %191 = vmatprep.subr.mxu0 0.0
    %192 = vmatpush2.msra.mxu0 0.0
    %193 = vmatprep.subr.mxu0 0.0
    %194 = vmatpush2.msra.mxu0 0.0
    %195 = vmatprep.mubr.f32.mxu0 0.0
    %196 = vmatmul.mubr.f32.gmra.mxu0 %v108
    %v197 = vpop.f32.mrf.mxu0
    %v198 = vadd.f32 %v99, %v197
    %v199 = vpop.f32.mrf.mxu0
    %v200 = vadd.f32 %v103, %v199
    %201 = vmatprep.mubr.f32.mxu0 0.0
    %202 = vmatmul.mubr.f32.gmra.mxu0 %v111
    %v203 = vpop.f32.mrf.mxu0
    %v204 = vadd.f32 %v99, %v203
    %v205 = vpop.f32.mrf.mxu0
    %v206 = vadd.f32 %v103, %v205
    %207 = vmatprep.mubr.f32.mxu0 0.0
    %208 = vmatmul.mubr.f32.gmra.mxu0 %v114
    %v209 = vpop.f32.mrf.mxu0
    %v210 = vadd.f32 %v99, %v209
    %v211 = vpop.f32.mrf.mxu0
    %v212 = vadd.f32 %v103, %v211
    %213 = vmatprep.mubr.f32.mxu0 0.0
    %214 = vmatmul.mubr.f32.gmra.mxu0 %v117
    %v215 = vpop.f32.mrf.mxu0
    %v216 = vadd.f32 %v99, %v215
    %v217 = vpop.f32.mrf.mxu0
    %v218 = vadd.f32 %v103, %v217
    %219 = vmatprep.mubr.f32.mxu0 0.0
    %220 = vmatmul.mubr.f32.gmra.mxu0 %v120
    %v221 = vpop.f32.mrf.mxu0
    %v222 = vadd.f32 %v99, %v221
    %v223 = vpop.f32.mrf.mxu0
    %v224 = vadd.f32 %v103, %v223
    %225 = vmatprep.mubr.f32.mxu0 0.0
    %226 = vmatmul.mubr.f32.gmra.mxu0 %v123
    %v227 = vpop.f32.mrf.mxu0
    %v228 = vadd.f32 %v99, %v227
    %v229 = vpop.f32.mrf.mxu0
    %v230 = vadd.f32 %v103, %v229
    %231 = vmatprep.mubr.f32.mxu0 0.0
    %232 = vmatmul.mubr.f32.gmra.mxu0 %v126
    %v233 = vpop.f32.mrf.mxu0
    %v234 = vadd.f32 %v99, %v233
    %v235 = vpop.f32.mrf.mxu0
    %v236 = vadd.f32 %v103, %v235
    %237 = vmatprep.mubr.f32.mxu0 0.0
    %238 = vmatmul.mubr.f32.gmra.mxu0 %v129
    %v239 = vpop.f32.mrf.mxu0
    %v240 = vadd.f32 %v99, %v239
    %v241 = vpop.f32.mrf.mxu0
    %v242 = vadd.f32 %v103, %v241
    %243 = vdwg.mxu0
    %v245 = vlaneseq
    %v246 = vshrl.u32 %v245, 7
    %v247 = vsub.s32 0, %v246
    %v248 = vrot.slane %v86, %v247
    %v249 = vlaneseq
    %v250 = vshrl.u32 %v249, 7
    %v251 = vsub.s32 1, %v250
    %v252 = vrot.slane %v86, %v251
    %vm255 = vcmask 523264
    %v257 = vsel %vm255, 0.0, 0
    %259 = vmatprep.subr.mxu0 0.0
    %260 = vmatpush1.msra.mxu0 0.0
    %261 = vmatprep.subr.mxu0 0.0
    %262 = vmatpush1.msra.mxu0 0.0
    %263 = vmatprep.subr.mxu0 0.0
    %264 = vmatpush1.msra.mxu0 0.0
    %265 = vmatprep.subr.mxu0 0.0
    %266 = vmatpush1.msra.mxu0 0.0
    %267 = vmatprep.subr.mxu0 0.0
    %268 = vmatpush1.msra.mxu0 0.0
    %269 = vmatprep.subr.mxu0 0.0
    %270 = vmatpush1.msra.mxu0 0.0
    %271 = vmatprep.subr.mxu0 0.0
    %272 = vmatpush1.msra.mxu0 0.0
    %273 = vmatprep.subr.mxu0 0.0
    %274 = vmatpush1.msra.mxu0 0.0
    %275 = vmatprep.subr.mxu0 %v50
    %276 = vmatpush1.msra.mxu0 %v49
    %277 = vmatprep.subr.mxu0 %v48
    %278 = vmatpush1.msra.mxu0 %v47
    %279 = vmatprep.subr.mxu0 %v46
    %280 = vmatpush1.msra.mxu0 %v45
    %281 = vmatprep.subr.mxu0 %v44
    %282 = vmatpush1.msra.mxu0 %v43
    %283 = vmatprep.subr.mxu0 %v42
    %284 = vmatpush1.msra.mxu0 %v41
    %285 = vmatprep.subr.mxu0 %v40
    %286 = vmatpush1.msra.mxu0 %v39
    %287 = vmatprep.subr.mxu0 %v38
    %288 = vmatpush1.msra.mxu0 %v37
    %289 = vmatprep.subr.mxu0 %v36
    %290 = vmatpush1.msra.mxu0 %v35
    %291 = vmatprep.subr.mxu0 0.0
    %292 = vmatpush2.msra.mxu0 0.0
    %293 = vmatprep.subr.mxu0 0.0
    %294 = vmatpush2.msra.mxu0 0.0
    %295 = vmatprep.subr.mxu0 0.0
    %296 = vmatpush2.msra.mxu0 0.0
    %297 = vmatprep.subr.mxu0 0.0
    %298 = vmatpush2.msra.mxu0 0.0
    %299 = vmatprep.subr.mxu0 0.0
    %300 = vmatpush2.msra.mxu0 0.0
    %301 = vmatprep.subr.mxu0 0.0
    %302 = vmatpush2.msra.mxu0 0.0
    %303 = vmatprep.subr.mxu0 0.0
    %304 = vmatpush2.msra.mxu0 0.0
    %305 = vmatprep.subr.mxu0 0.0
    %306 = vmatpush2.msra.mxu0 0.0
    %307 = vmatprep.subr.mxu0 0.0
    %308 = vmatpush2.msra.mxu0 0.0
    %309 = vmatprep.subr.mxu0 0.0
    %310 = vmatpush2.msra.mxu0 0.0
    %311 = vmatprep.subr.mxu0 0.0
    %312 = vmatpush2.msra.mxu0 0.0
    %313 = vmatprep.subr.mxu0 0.0
    %314 = vmatpush2.msra.mxu0 0.0
    %315 = vmatprep.subr.mxu0 0.0
    %316 = vmatpush2.msra.mxu0 0.0
    %317 = vmatprep.subr.mxu0 0.0
    %318 = vmatpush2.msra.mxu0 0.0
    %319 = vmatprep.subr.mxu0 0.0
    %320 = vmatpush2.msra.mxu0 0.0
    %321 = vmatprep.subr.mxu0 0.0
    %322 = vmatpush2.msra.mxu0 0.0
    %323 = vmatprep.mubr.f32.mxu0 0.0
    %324 = vmatmul.mubr.f32.gmra.mxu0 %v257
    %v325 = vpop.f32.mrf.mxu0
    %v326 = vadd.f32 0.0, %v325
    %v327 = vpop.f32.mrf.mxu0
    %v328 = vadd.f32 0.0, %v327
    %329 = vdwg.mxu0
    %v330 = vadd.f32 %v198, %v326
    %v331 = vadd.f32 %v200, %v328
    %v332 = vxor.u32 %v330, 2147483648
    %v333 = vxor.u32 %v331, 2147483648
    %v334 = vmul.f32 %v332, 1.442695
    %v335 = vpow.pop %v334
    %v336 = vmul.f32 %v333, 1.442695
    %v337 = vpow.pop %v336
    %v338 = vadd.f32 %v335, 1.0
    %v339 = vadd.f32 %v337, 1.0
    %v340 = vrcp.pop %v338
    %v341 = vmul.f32 1.0, %v340
    %v342 = vrcp.pop %v339
    %v343 = vmul.f32 1.0, %v342
    %v344 = vmul.f32 %v343, 2.0
    %v345 = vsub.f32 %v344, 1.0
    %v346 = vmul.f32 %v341, 0.0
    %v347 = vmul.f32 %v341, %v345
    %349 = vrot.lane.b32.xlu0 %v347, 64
    %v350 = vpop.permute.xlu0 %349
    %v352 = vadd.f32 %v346, %v350
    %v353 = vtanh.pop %v352
    %v354 = vmul.f32 %v343, %v353
    %356 = vrot.lane.b32.xlu0 %v354, 64
    %v357 = vpop.permute.xlu0 %356
    %v359 = vsel %vm255, %v357, 0.0
    %360 = vmatprep.subr.mxu0 %v82
    %361 = vmatpush1.msra.mxu0 %v81
    %362 = vmatprep.subr.mxu0 %v80
    %363 = vmatpush1.msra.mxu0 %v79
    %364 = vmatprep.subr.mxu0 %v78
    %365 = vmatpush1.msra.mxu0 %v77
    %366 = vmatprep.subr.mxu0 %v76
    %367 = vmatpush1.msra.mxu0 %v75
    %368 = vmatprep.subr.mxu0 %v74
    %369 = vmatpush1.msra.mxu0 %v73
    %370 = vmatprep.subr.mxu0 %v72
    %371 = vmatpush1.msra.mxu0 %v71
    %372 = vmatprep.subr.mxu0 %v70
    %373 = vmatpush1.msra.mxu0 %v69
    %374 = vmatprep.subr.mxu0 %v68
    %375 = vmatpush1.msra.mxu0 %v67
    %376 = vmatprep.subr.mxu0 %v66
    %377 = vmatpush1.msra.mxu0 %v65
    %378 = vmatprep.subr.mxu0 %v64
    %379 = vmatpush1.msra.mxu0 %v63
    %380 = vmatprep.subr.mxu0 %v62
    %381 = vmatpush1.msra.mxu0 %v61
    %382 = vmatprep.subr.mxu0 %v60
    %383 = vmatpush1.msra.mxu0 %v59
    %384 = vmatprep.subr.mxu0 %v58
    %385 = vmatpush1.msra.mxu0 %v57
    %386 = vmatprep.subr.mxu0 %v56
    %387 = vmatpush1.msra.mxu0 %v55
    %388 = vmatprep.subr.mxu0 %v54
    %389 = vmatpush1.msra.mxu0 %v53
    %390 = vmatprep.subr.mxu0 %v52
    %391 = vmatpush1.msra.mxu0 %v51
    %392 = vmatprep.subr.mxu0 0.0
    %393 = vmatpush2.msra.mxu0 0.0
    %394 = vmatprep.subr.mxu0 0.0
    %395 = vmatpush2.msra.mxu0 0.0
    %396 = vmatprep.subr.mxu0 0.0
    %397 = vmatpush2.msra.mxu0 0.0
    %398 = vmatprep.subr.mxu0 0.0
    %399 = vmatpush2.msra.mxu0 0.0
    %400 = vmatprep.subr.mxu0 0.0
    %401 = vmatpush2.msra.mxu0 0.0
    %402 = vmatprep.subr.mxu0 0.0
    %403 = vmatpush2.msra.mxu0 0.0
    %404 = vmatprep.subr.mxu0 0.0
    %405 = vmatpush2.msra.mxu0 0.0
    %406 = vmatprep.subr.mxu0 0.0
    %407 = vmatpush2.msra.mxu0 0.0
    %408 = vmatprep.subr.mxu0 0.0
    %409 = vmatpush2.msra.mxu0 0.0
    %410 = vmatprep.subr.mxu0 0.0
    %411 = vmatpush2.msra.mxu0 0.0
    %412 = vmatprep.subr.mxu0 0.0
    %413 = vmatpush2.msra.mxu0 0.0
    %414 = vmatprep.subr.mxu0 0.0
    %415 = vmatpush2.msra.mxu0 0.0
    %416 = vmatprep.subr.mxu0 0.0
    %417 = vmatpush2.msra.mxu0 0.0
    %418 = vmatprep.subr.mxu0 0.0
    %419 = vmatpush2.msra.mxu0 0.0
    %420 = vmatprep.subr.mxu0 0.0
    %421 = vmatpush2.msra.mxu0 0.0
    %422 = vmatprep.subr.mxu0 0.0
    %423 = vmatpush2.msra.mxu0 0.0
    %424 = vmatprep.mubr.f32.mxu0 0.0
    %425 = vmatmul.mubr.f32.gmra.mxu0 %v359
    %v426 = vpop.f32.mrf.mxu0
    %v427 = vadd.f32 %v248, %v426
    %v428 = vpop.f32.mrf.mxu0
    %v429 = vadd.f32 %v252, %v428
    %430 = vdwg.mxu0
    %v431 = vxor.u32 %v427, 2147483648
    %v432 = vxor.u32 %v429, 2147483648
    %v433 = vmul.f32 %v431, 1.442695
    %v434 = vpow.pop %v433
    %v435 = vmul.f32 %v432, 1.442695
    %v436 = vpow.pop %v435
    %v437 = vadd.f32 %v434, 1.0
    %v438 = vadd.f32 %v436, 1.0
    %v439 = vrcp.pop %v437
    %v440 = vmul.f32 1.0, %v439
    %v441 = vrcp.pop %v438
    %v442 = vmul.f32 1.0, %v441
    %v443 = vmul.f32 %v442, 2.0
    %v444 = vsub.f32 %v443, 1.0
    %v445 = vmul.f32 %v440, 0.0
    %v446 = vmul.f32 %v440, %v444
    %448 = vrot.lane.b32.xlu0 %v446, 64
    %v449 = vpop.permute.xlu0 %448
    %v451 = vadd.f32 %v445, %v449
    %v452 = vtanh.pop %v451
    %v453 = vmul.f32 %v442, %v452
    %v454 = vsel %vm255, %v357, 0
    %456 = vmatprep.subr.mxu0 0.0
    %457 = vmatpush1.msra.mxu0 0.0
    %458 = vmatprep.subr.mxu0 0.0
    %459 = vmatpush1.msra.mxu0 0.0
    %460 = vmatprep.subr.mxu0 0.0
    %461 = vmatpush1.msra.mxu0 0.0
    %462 = vmatprep.subr.mxu0 0.0
    %463 = vmatpush1.msra.mxu0 0.0
    %464 = vmatprep.subr.mxu0 0.0
    %465 = vmatpush1.msra.mxu0 0.0
    %466 = vmatprep.subr.mxu0 0.0
    %467 = vmatpush1.msra.mxu0 0.0
    %468 = vmatprep.subr.mxu0 0.0
    %469 = vmatpush1.msra.mxu0 0.0
    %470 = vmatprep.subr.mxu0 0.0
    %471 = vmatpush1.msra.mxu0 0.0
    %472 = vmatprep.subr.mxu0 %v50
    %473 = vmatpush1.msra.mxu0 %v49
    %474 = vmatprep.subr.mxu0 %v48
    %475 = vmatpush1.msra.mxu0 %v47
    %476 = vmatprep.subr.mxu0 %v46
    %477 = vmatpush1.msra.mxu0 %v45
    %478 = vmatprep.subr.mxu0 %v44
    %479 = vmatpush1.msra.mxu0 %v43
    %480 = vmatprep.subr.mxu0 %v42
    %481 = vmatpush1.msra.mxu0 %v41
    %482 = vmatprep.subr.mxu0 %v40
    %483 = vmatpush1.msra.mxu0 %v39
    %484 = vmatprep.subr.mxu0 %v38
    %485 = vmatpush1.msra.mxu0 %v37
    %486 = vmatprep.subr.mxu0 %v36
    %487 = vmatpush1.msra.mxu0 %v35
    %488 = vmatprep.subr.mxu0 0.0
    %489 = vmatpush2.msra.mxu0 0.0
    %490 = vmatprep.subr.mxu0 0.0
    %491 = vmatpush2.msra.mxu0 0.0
    %492 = vmatprep.subr.mxu0 0.0
    %493 = vmatpush2.msra.mxu0 0.0
    %494 = vmatprep.subr.mxu0 0.0
    %495 = vmatpush2.msra.mxu0 0.0
    %496 = vmatprep.subr.mxu0 0.0
    %497 = vmatpush2.msra.mxu0 0.0
    %498 = vmatprep.subr.mxu0 0.0
    %499 = vmatpush2.msra.mxu0 0.0
    %500 = vmatprep.subr.mxu0 0.0
    %501 = vmatpush2.msra.mxu0 0.0
    %502 = vmatprep.subr.mxu0 0.0
    %503 = vmatpush2.msra.mxu0 0.0
    %504 = vmatprep.subr.mxu0 0.0
    %505 = vmatpush2.msra.mxu0 0.0
    %506 = vmatprep.subr.mxu0 0.0
    %507 = vmatpush2.msra.mxu0 0.0
    %508 = vmatprep.subr.mxu0 0.0
    %509 = vmatpush2.msra.mxu0 0.0
    %510 = vmatprep.subr.mxu0 0.0
    %511 = vmatpush2.msra.mxu0 0.0
    %512 = vmatprep.subr.mxu0 0.0
    %513 = vmatpush2.msra.mxu0 0.0
    %514 = vmatprep.subr.mxu0 0.0
    %515 = vmatpush2.msra.mxu0 0.0
    %516 = vmatprep.subr.mxu0 0.0
    %517 = vmatpush2.msra.mxu0 0.0
    %518 = vmatprep.subr.mxu0 0.0
    %519 = vmatpush2.msra.mxu0 0.0
    %520 = vmatprep.mubr.f32.mxu0 0.0
    %521 = vmatmul.mubr.f32.gmra.mxu0 %v454
    %v522 = vpop.f32.mrf.mxu0
    %v523 = vadd.f32 0.0, %v522
    %v524 = vpop.f32.mrf.mxu0
    %v525 = vadd.f32 0.0, %v524
    %526 = vdwg.mxu0
    %v527 = vadd.f32 %v204, %v523
    %v528 = vadd.f32 %v206, %v525
    %v529 = vxor.u32 %v527, 2147483648
    %v530 = vxor.u32 %v528, 2147483648
    %v531 = vmul.f32 %v529, 1.442695
    %v532 = vpow.pop %v531
    %v533 = vmul.f32 %v530, 1.442695
    %v534 = vpow.pop %v533
    %v535 = vadd.f32 %v532, 1.0
    %v536 = vadd.f32 %v534, 1.0
    %v537 = vrcp.pop %v535
    %v538 = vmul.f32 1.0, %v537
    %v539 = vrcp.pop %v536
    %v540 = vmul.f32 1.0, %v539
    %v541 = vmul.f32 %v540, 2.0
    %v542 = vsub.f32 %v541, 1.0
    %v543 = vmul.f32 %v538, %v352
    %v544 = vmul.f32 %v538, %v542
    %546 = vrot.lane.b32.xlu0 %v544, 64
    %v547 = vpop.permute.xlu0 %546
    %v549 = vadd.f32 %v543, %v547
    %v550 = vtanh.pop %v549
    %v551 = vmul.f32 %v540, %v550
    %553 = vrot.lane.b32.xlu0 %v551, 64
    %v554 = vpop.permute.xlu0 %553
    %v556 = vsel %vm255, %v554, %v453
    %557 = vmatprep.subr.mxu0 %v82
    %558 = vmatpush1.msra.mxu0 %v81
    %559 = vmatprep.subr.mxu0 %v80
    %560 = vmatpush1.msra.mxu0 %v79
    %561 = vmatprep.subr.mxu0 %v78
    %562 = vmatpush1.msra.mxu0 %v77
    %563 = vmatprep.subr.mxu0 %v76
    %564 = vmatpush1.msra.mxu0 %v75
    %565 = vmatprep.subr.mxu0 %v74
    %566 = vmatpush1.msra.mxu0 %v73
    %567 = vmatprep.subr.mxu0 %v72
    %568 = vmatpush1.msra.mxu0 %v71
    %569 = vmatprep.subr.mxu0 %v70
    %570 = vmatpush1.msra.mxu0 %v69
    %571 = vmatprep.subr.mxu0 %v68
    %572 = vmatpush1.msra.mxu0 %v67
    %573 = vmatprep.subr.mxu0 %v66
    %574 = vmatpush1.msra.mxu0 %v65
    %575 = vmatprep.subr.mxu0 %v64
    %576 = vmatpush1.msra.mxu0 %v63
    %577 = vmatprep.subr.mxu0 %v62
    %578 = vmatpush1.msra.mxu0 %v61
    %579 = vmatprep.subr.mxu0 %v60
    %580 = vmatpush1.msra.mxu0 %v59
    %581 = vmatprep.subr.mxu0 %v58
    %582 = vmatpush1.msra.mxu0 %v57
    %583 = vmatprep.subr.mxu0 %v56
    %584 = vmatpush1.msra.mxu0 %v55
    %585 = vmatprep.subr.mxu0 %v54
    %586 = vmatpush1.msra.mxu0 %v53
    %587 = vmatprep.subr.mxu0 %v52
    %588 = vmatpush1.msra.mxu0 %v51
    %589 = vmatprep.subr.mxu0 0.0
    %590 = vmatpush2.msra.mxu0 0.0
    %591 = vmatprep.subr.mxu0 0.0
    %592 = vmatpush2.msra.mxu0 0.0
    %593 = vmatprep.subr.mxu0 0.0
    %594 = vmatpush2.msra.mxu0 0.0
    %595 = vmatprep.subr.mxu0 0.0
    %596 = vmatpush2.msra.mxu0 0.0
    %597 = vmatprep.subr.mxu0 0.0
    %598 = vmatpush2.msra.mxu0 0.0
    %599 = vmatprep.subr.mxu0 0.0
    %600 = vmatpush2.msra.mxu0 0.0
    %601 = vmatprep.subr.mxu0 0.0
    %602 = vmatpush2.msra.mxu0 0.0
    %603 = vmatprep.subr.mxu0 0.0
    %604 = vmatpush2.msra.mxu0 0.0
    %605 = vmatprep.subr.mxu0 0.0
    %606 = vmatpush2.msra.mxu0 0.0
    %607 = vmatprep.subr.mxu0 0.0
    %608 = vmatpush2.msra.mxu0 0.0
    %609 = vmatprep.subr.mxu0 0.0
    %610 = vmatpush2.msra.mxu0 0.0
    %611 = vmatprep.subr.mxu0 0.0
    %612 = vmatpush2.msra.mxu0 0.0
    %613 = vmatprep.subr.mxu0 0.0
    %614 = vmatpush2.msra.mxu0 0.0
    %615 = vmatprep.subr.mxu0 0.0
    %616 = vmatpush2.msra.mxu0 0.0
    %617 = vmatprep.subr.mxu0 0.0
    %618 = vmatpush2.msra.mxu0 0.0
    %619 = vmatprep.subr.mxu0 0.0
    %620 = vmatpush2.msra.mxu0 0.0
    %621 = vmatprep.mubr.f32.mxu0 0.0
    %622 = vmatmul.mubr.f32.gmra.mxu0 %v556
    %v623 = vpop.f32.mrf.mxu0
    %v624 = vadd.f32 %v248, %v623
    %v625 = vpop.f32.mrf.mxu0
    %v626 = vadd.f32 %v252, %v625
    %627 = vdwg.mxu0
    %v628 = vxor.u32 %v624, 2147483648
    %v629 = vxor.u32 %v626, 2147483648
    %v630 = vmul.f32 %v628, 1.442695
    %v631 = vpow.pop %v630
    %v632 = vmul.f32 %v629, 1.442695
    %v633 = vpow.pop %v632
    %v634 = vadd.f32 %v631, 1.0
    %v635 = vadd.f32 %v633, 1.0
    %v636 = vrcp.pop %v634
    %v637 = vmul.f32 1.0, %v636
    %v638 = vrcp.pop %v635
    %v639 = vmul.f32 1.0, %v638
    %v640 = vmul.f32 %v639, 2.0
    %v641 = vsub.f32 %v640, 1.0
    %v642 = vmul.f32 %v637, %v451
    %v643 = vmul.f32 %v637, %v641
    %645 = vrot.lane.b32.xlu0 %v643, 64
    %v646 = vpop.permute.xlu0 %645
    %v648 = vadd.f32 %v642, %v646
    %v649 = vtanh.pop %v648
    %v650 = vmul.f32 %v639, %v649
    %v651 = vsel %vm255, %v554, 0
    %653 = vmatprep.subr.mxu0 0.0
    %654 = vmatpush1.msra.mxu0 0.0
    %655 = vmatprep.subr.mxu0 0.0
    %656 = vmatpush1.msra.mxu0 0.0
    %657 = vmatprep.subr.mxu0 0.0
    %658 = vmatpush1.msra.mxu0 0.0
    %659 = vmatprep.subr.mxu0 0.0
    %660 = vmatpush1.msra.mxu0 0.0
    %661 = vmatprep.subr.mxu0 0.0
    %662 = vmatpush1.msra.mxu0 0.0
    %663 = vmatprep.subr.mxu0 0.0
    %664 = vmatpush1.msra.mxu0 0.0
    %665 = vmatprep.subr.mxu0 0.0
    %666 = vmatpush1.msra.mxu0 0.0
    %667 = vmatprep.subr.mxu0 0.0
    %668 = vmatpush1.msra.mxu0 0.0
    %669 = vmatprep.subr.mxu0 %v50
    %670 = vmatpush1.msra.mxu0 %v49
    %671 = vmatprep.subr.mxu0 %v48
    %672 = vmatpush1.msra.mxu0 %v47
    %673 = vmatprep.subr.mxu0 %v46
    %674 = vmatpush1.msra.mxu0 %v45
    %675 = vmatprep.subr.mxu0 %v44
    %676 = vmatpush1.msra.mxu0 %v43
    %677 = vmatprep.subr.mxu0 %v42
    %678 = vmatpush1.msra.mxu0 %v41
    %679 = vmatprep.subr.mxu0 %v40
    %680 = vmatpush1.msra.mxu0 %v39
    %681 = vmatprep.subr.mxu0 %v38
    %682 = vmatpush1.msra.mxu0 %v37
    %683 = vmatprep.subr.mxu0 %v36
    %684 = vmatpush1.msra.mxu0 %v35
    %685 = vmatprep.subr.mxu0 0.0
    %686 = vmatpush2.msra.mxu0 0.0
    %687 = vmatprep.subr.mxu0 0.0
    %688 = vmatpush2.msra.mxu0 0.0
    %689 = vmatprep.subr.mxu0 0.0
    %690 = vmatpush2.msra.mxu0 0.0
    %691 = vmatprep.subr.mxu0 0.0
    %692 = vmatpush2.msra.mxu0 0.0
    %693 = vmatprep.subr.mxu0 0.0
    %694 = vmatpush2.msra.mxu0 0.0
    %695 = vmatprep.subr.mxu0 0.0
    %696 = vmatpush2.msra.mxu0 0.0
    %697 = vmatprep.subr.mxu0 0.0
    %698 = vmatpush2.msra.mxu0 0.0
    %699 = vmatprep.subr.mxu0 0.0
    %700 = vmatpush2.msra.mxu0 0.0
    %701 = vmatprep.subr.mxu0 0.0
    %702 = vmatpush2.msra.mxu0 0.0
    %703 = vmatprep.subr.mxu0 0.0
    %704 = vmatpush2.msra.mxu0 0.0
    %705 = vmatprep.subr.mxu0 0.0
    %706 = vmatpush2.msra.mxu0 0.0
    %707 = vmatprep.subr.mxu0 0.0
    %708 = vmatpush2.msra.mxu0 0.0
    %709 = vmatprep.subr.mxu0 0.0
    %710 = vmatpush2.msra.mxu0 0.0
    %711 = vmatprep.subr.mxu0 0.0
    %712 = vmatpush2.msra.mxu0 0.0
    %713 = vmatprep.subr.mxu0 0.0
    %714 = vmatpush2.msra.mxu0 0.0
    %715 = vmatprep.subr.mxu0 0.0
    %716 = vmatpush2.msra.mxu0 0.0
    %717 = vmatprep.mubr.f32.mxu0 0.0
    %718 = vmatmul.mubr.f32.gmra.mxu0 %v651
    %v719 = vpop.f32.mrf.mxu0
    %v720 = vadd.f32 0.0, %v719
    %v721 = vpop.f32.mrf.mxu0
    %v722 = vadd.f32 0.0, %v721
    %723 = vdwg.mxu0
    %v724 = vadd.f32 %v210, %v720
    %v725 = vadd.f32 %v212, %v722
    %v726 = vxor.u32 %v724, 2147483648
    %v727 = vxor.u32 %v725, 2147483648
    %v728 = vmul.f32 %v726, 1.442695
    %v729 = vpow.pop %v728
    %v730 = vmul.f32 %v727, 1.442695
    %v731 = vpow.pop %v730
    %v732 = vadd.f32 %v729, 1.0
    %v733 = vadd.f32 %v731, 1.0
    %v734 = vrcp.pop %v732
    %v735 = vmul.f32 1.0, %v734
    %v736 = vrcp.pop %v733
    %v737 = vmul.f32 1.0, %v736
    %v738 = vmul.f32 %v737, 2.0
    %v739 = vsub.f32 %v738, 1.0
    %v740 = vmul.f32 %v735, %v549
    %v741 = vmul.f32 %v735, %v739
    %743 = vrot.lane.b32.xlu0 %v741, 64
    %v744 = vpop.permute.xlu0 %743
    %v746 = vadd.f32 %v740, %v744
    %v747 = vtanh.pop %v746
    %v748 = vmul.f32 %v737, %v747
    %750 = vrot.lane.b32.xlu0 %v748, 64
    %v751 = vpop.permute.xlu0 %750
    %v753 = vsel %vm255, %v751, %v650
    %754 = vmatprep.subr.mxu0 %v82
    %755 = vmatpush1.msra.mxu0 %v81
    %756 = vmatprep.subr.mxu0 %v80
    %757 = vmatpush1.msra.mxu0 %v79
    %758 = vmatprep.subr.mxu0 %v78
    %759 = vmatpush1.msra.mxu0 %v77
    %760 = vmatprep.subr.mxu0 %v76
    %761 = vmatpush1.msra.mxu0 %v75
    %762 = vmatprep.subr.mxu0 %v74
    %763 = vmatpush1.msra.mxu0 %v73
    %764 = vmatprep.subr.mxu0 %v72
    %765 = vmatpush1.msra.mxu0 %v71
    %766 = vmatprep.subr.mxu0 %v70
    %767 = vmatpush1.msra.mxu0 %v69
    %768 = vmatprep.subr.mxu0 %v68
    %769 = vmatpush1.msra.mxu0 %v67
    %770 = vmatprep.subr.mxu0 %v66
    %771 = vmatpush1.msra.mxu0 %v65
    %772 = vmatprep.subr.mxu0 %v64
    %773 = vmatpush1.msra.mxu0 %v63
    %774 = vmatprep.subr.mxu0 %v62
    %775 = vmatpush1.msra.mxu0 %v61
    %776 = vmatprep.subr.mxu0 %v60
    %777 = vmatpush1.msra.mxu0 %v59
    %778 = vmatprep.subr.mxu0 %v58
    %779 = vmatpush1.msra.mxu0 %v57
    %780 = vmatprep.subr.mxu0 %v56
    %781 = vmatpush1.msra.mxu0 %v55
    %782 = vmatprep.subr.mxu0 %v54
    %783 = vmatpush1.msra.mxu0 %v53
    %784 = vmatprep.subr.mxu0 %v52
    %785 = vmatpush1.msra.mxu0 %v51
    %786 = vmatprep.subr.mxu0 0.0
    %787 = vmatpush2.msra.mxu0 0.0
    %788 = vmatprep.subr.mxu0 0.0
    %789 = vmatpush2.msra.mxu0 0.0
    %790 = vmatprep.subr.mxu0 0.0
    %791 = vmatpush2.msra.mxu0 0.0
    %792 = vmatprep.subr.mxu0 0.0
    %793 = vmatpush2.msra.mxu0 0.0
    %794 = vmatprep.subr.mxu0 0.0
    %795 = vmatpush2.msra.mxu0 0.0
    %796 = vmatprep.subr.mxu0 0.0
    %797 = vmatpush2.msra.mxu0 0.0
    %798 = vmatprep.subr.mxu0 0.0
    %799 = vmatpush2.msra.mxu0 0.0
    %800 = vmatprep.subr.mxu0 0.0
    %801 = vmatpush2.msra.mxu0 0.0
    %802 = vmatprep.subr.mxu0 0.0
    %803 = vmatpush2.msra.mxu0 0.0
    %804 = vmatprep.subr.mxu0 0.0
    %805 = vmatpush2.msra.mxu0 0.0
    %806 = vmatprep.subr.mxu0 0.0
    %807 = vmatpush2.msra.mxu0 0.0
    %808 = vmatprep.subr.mxu0 0.0
    %809 = vmatpush2.msra.mxu0 0.0
    %810 = vmatprep.subr.mxu0 0.0
    %811 = vmatpush2.msra.mxu0 0.0
    %812 = vmatprep.subr.mxu0 0.0
    %813 = vmatpush2.msra.mxu0 0.0
    %814 = vmatprep.subr.mxu0 0.0
    %815 = vmatpush2.msra.mxu0 0.0
    %816 = vmatprep.subr.mxu0 0.0
    %817 = vmatpush2.msra.mxu0 0.0
    %818 = vmatprep.mubr.f32.mxu0 0.0
    %819 = vmatmul.mubr.f32.gmra.mxu0 %v753
    %v820 = vpop.f32.mrf.mxu0
    %v821 = vadd.f32 %v248, %v820
    %v822 = vpop.f32.mrf.mxu0
    %v823 = vadd.f32 %v252, %v822
    %824 = vdwg.mxu0
    %v825 = vxor.u32 %v821, 2147483648
    %v826 = vxor.u32 %v823, 2147483648
    %v827 = vmul.f32 %v825, 1.442695
    %v828 = vpow.pop %v827
    %v829 = vmul.f32 %v826, 1.442695
    %v830 = vpow.pop %v829
    %v831 = vadd.f32 %v828, 1.0
    %v832 = vadd.f32 %v830, 1.0
    %v833 = vrcp.pop %v831
    %v834 = vmul.f32 1.0, %v833
    %v835 = vrcp.pop %v832
    %v836 = vmul.f32 1.0, %v835
    %v837 = vmul.f32 %v836, 2.0
    %v838 = vsub.f32 %v837, 1.0
    %v839 = vmul.f32 %v834, %v648
    %v840 = vmul.f32 %v834, %v838
    %842 = vrot.lane.b32.xlu0 %v840, 64
    %v843 = vpop.permute.xlu0 %842
    %v845 = vadd.f32 %v839, %v843
    %v846 = vtanh.pop %v845
    %v847 = vmul.f32 %v836, %v846
    %v848 = vsel %vm255, %v751, 0
    %850 = vmatprep.subr.mxu0 0.0
    %851 = vmatpush1.msra.mxu0 0.0
    %852 = vmatprep.subr.mxu0 0.0
    %853 = vmatpush1.msra.mxu0 0.0
    %854 = vmatprep.subr.mxu0 0.0
    %855 = vmatpush1.msra.mxu0 0.0
    %856 = vmatprep.subr.mxu0 0.0
    %857 = vmatpush1.msra.mxu0 0.0
    %858 = vmatprep.subr.mxu0 0.0
    %859 = vmatpush1.msra.mxu0 0.0
    %860 = vmatprep.subr.mxu0 0.0
    %861 = vmatpush1.msra.mxu0 0.0
    %862 = vmatprep.subr.mxu0 0.0
    %863 = vmatpush1.msra.mxu0 0.0
    %864 = vmatprep.subr.mxu0 0.0
    %865 = vmatpush1.msra.mxu0 0.0
    %866 = vmatprep.subr.mxu0 %v50
    %867 = vmatpush1.msra.mxu0 %v49
    %868 = vmatprep.subr.mxu0 %v48
    %869 = vmatpush1.msra.mxu0 %v47
    %870 = vmatprep.subr.mxu0 %v46
    %871 = vmatpush1.msra.mxu0 %v45
    %872 = vmatprep.subr.mxu0 %v44
    %873 = vmatpush1.msra.mxu0 %v43
    %874 = vmatprep.subr.mxu0 %v42
    %875 = vmatpush1.msra.mxu0 %v41
    %876 = vmatprep.subr.mxu0 %v40
    %877 = vmatpush1.msra.mxu0 %v39
    %878 = vmatprep.subr.mxu0 %v38
    %879 = vmatpush1.msra.mxu0 %v37
    %880 = vmatprep.subr.mxu0 %v36
    %881 = vmatpush1.msra.mxu0 %v35
    %882 = vmatprep.subr.mxu0 0.0
    %883 = vmatpush2.msra.mxu0 0.0
    %884 = vmatprep.subr.mxu0 0.0
    %885 = vmatpush2.msra.mxu0 0.0
    %886 = vmatprep.subr.mxu0 0.0
    %887 = vmatpush2.msra.mxu0 0.0
    %888 = vmatprep.subr.mxu0 0.0
    %889 = vmatpush2.msra.mxu0 0.0
    %890 = vmatprep.subr.mxu0 0.0
    %891 = vmatpush2.msra.mxu0 0.0
    %892 = vmatprep.subr.mxu0 0.0
    %893 = vmatpush2.msra.mxu0 0.0
    %894 = vmatprep.subr.mxu0 0.0
    %895 = vmatpush2.msra.mxu0 0.0
    %896 = vmatprep.subr.mxu0 0.0
    %897 = vmatpush2.msra.mxu0 0.0
    %898 = vmatprep.subr.mxu0 0.0
    %899 = vmatpush2.msra.mxu0 0.0
    %900 = vmatprep.subr.mxu0 0.0
    %901 = vmatpush2.msra.mxu0 0.0
    %902 = vmatprep.subr.mxu0 0.0
    %903 = vmatpush2.msra.mxu0 0.0
    %904 = vmatprep.subr.mxu0 0.0
    %905 = vmatpush2.msra.mxu0 0.0
    %906 = vmatprep.subr.mxu0 0.0
    %907 = vmatpush2.msra.mxu0 0.0
    %908 = vmatprep.subr.mxu0 0.0
    %909 = vmatpush2.msra.mxu0 0.0
    %910 = vmatprep.subr.mxu0 0.0
    %911 = vmatpush2.msra.mxu0 0.0
    %912 = vmatprep.subr.mxu0 0.0
    %913 = vmatpush2.msra.mxu0 0.0
    %914 = vmatprep.mubr.f32.mxu0 0.0
    %915 = vmatmul.mubr.f32.gmra.mxu0 %v848
    %v916 = vpop.f32.mrf.mxu0
    %v917 = vadd.f32 0.0, %v916
    %v918 = vpop.f32.mrf.mxu0
    %v919 = vadd.f32 0.0, %v918
    %920 = vdwg.mxu0
    %v921 = vadd.f32 %v216, %v917
    %v922 = vadd.f32 %v218, %v919
    %v923 = vxor.u32 %v921, 2147483648
    %v924 = vxor.u32 %v922, 2147483648
    %v925 = vmul.f32 %v923, 1.442695
    %v926 = vpow.pop %v925
    %v927 = vmul.f32 %v924, 1.442695
    %v928 = vpow.pop %v927
    %v929 = vadd.f32 %v926, 1.0
    %v930 = vadd.f32 %v928, 1.0
    %v931 = vrcp.pop %v929
    %v932 = vmul.f32 1.0, %v931
    %v933 = vrcp.pop %v930
    %v934 = vmul.f32 1.0, %v933
    %v935 = vmul.f32 %v934, 2.0
    %v936 = vsub.f32 %v935, 1.0
    %v937 = vmul.f32 %v932, %v746
    %v938 = vmul.f32 %v932, %v936
    %940 = vrot.lane.b32.xlu0 %v938, 64
    %v941 = vpop.permute.xlu0 %940
    %v943 = vadd.f32 %v937, %v941
    %v944 = vtanh.pop %v943
    %v945 = vmul.f32 %v934, %v944
    %947 = vrot.lane.b32.xlu0 %v945, 64
    %v948 = vpop.permute.xlu0 %947
    %v950 = vsel %vm255, %v948, %v847
    %951 = vmatprep.subr.mxu0 %v82
    %952 = vmatpush1.msra.mxu0 %v81
    %953 = vmatprep.subr.mxu0 %v80
    %954 = vmatpush1.msra.mxu0 %v79
    %955 = vmatprep.subr.mxu0 %v78
    %956 = vmatpush1.msra.mxu0 %v77
    %957 = vmatprep.subr.mxu0 %v76
    %958 = vmatpush1.msra.mxu0 %v75
    %959 = vmatprep.subr.mxu0 %v74
    %960 = vmatpush1.msra.mxu0 %v73
    %961 = vmatprep.subr.mxu0 %v72
    %962 = vmatpush1.msra.mxu0 %v71
    %963 = vmatprep.subr.mxu0 %v70
    %964 = vmatpush1.msra.mxu0 %v69
    %965 = vmatprep.subr.mxu0 %v68
    %966 = vmatpush1.msra.mxu0 %v67
    %967 = vmatprep.subr.mxu0 %v66
    %968 = vmatpush1.msra.mxu0 %v65
    %969 = vmatprep.subr.mxu0 %v64
    %970 = vmatpush1.msra.mxu0 %v63
    %971 = vmatprep.subr.mxu0 %v62
    %972 = vmatpush1.msra.mxu0 %v61
    %973 = vmatprep.subr.mxu0 %v60
    %974 = vmatpush1.msra.mxu0 %v59
    %975 = vmatprep.subr.mxu0 %v58
    %976 = vmatpush1.msra.mxu0 %v57
    %977 = vmatprep.subr.mxu0 %v56
    %978 = vmatpush1.msra.mxu0 %v55
    %979 = vmatprep.subr.mxu0 %v54
    %980 = vmatpush1.msra.mxu0 %v53
    %981 = vmatprep.subr.mxu0 %v52
    %982 = vmatpush1.msra.mxu0 %v51
    %983 = vmatprep.subr.mxu0 0.0
    %984 = vmatpush2.msra.mxu0 0.0
    %985 = vmatprep.subr.mxu0 0.0
    %986 = vmatpush2.msra.mxu0 0.0
    %987 = vmatprep.subr.mxu0 0.0
    %988 = vmatpush2.msra.mxu0 0.0
    %989 = vmatprep.subr.mxu0 0.0
    %990 = vmatpush2.msra.mxu0 0.0
    %991 = vmatprep.subr.mxu0 0.0
    %992 = vmatpush2.msra.mxu0 0.0
    %993 = vmatprep.subr.mxu0 0.0
    %994 = vmatpush2.msra.mxu0 0.0
    %995 = vmatprep.subr.mxu0 0.0
    %996 = vmatpush2.msra.mxu0 0.0
    %997 = vmatprep.subr.mxu0 0.0
    %998 = vmatpush2.msra.mxu0 0.0
    %999 = vmatprep.subr.mxu0 0.0
    %1000 = vmatpush2.msra.mxu0 0.0
    %1001 = vmatprep.subr.mxu0 0.0
    %1002 = vmatpush2.msra.mxu0 0.0
    %1003 = vmatprep.subr.mxu0 0.0
    %1004 = vmatpush2.msra.mxu0 0.0
    %1005 = vmatprep.subr.mxu0 0.0
    %1006 = vmatpush2.msra.mxu0 0.0
    %1007 = vmatprep.subr.mxu0 0.0
    %1008 = vmatpush2.msra.mxu0 0.0
    %1009 = vmatprep.subr.mxu0 0.0
    %1010 = vmatpush2.msra.mxu0 0.0
    %1011 = vmatprep.subr.mxu0 0.0
    %1012 = vmatpush2.msra.mxu0 0.0
    %1013 = vmatprep.subr.mxu0 0.0
    %1014 = vmatpush2.msra.mxu0 0.0
    %1015 = vmatprep.mubr.f32.mxu0 0.0
    %1016 = vmatmul.mubr.f32.gmra.mxu0 %v950
    %v1017 = vpop.f32.mrf.mxu0
    %v1018 = vadd.f32 %v248, %v1017
    %v1019 = vpop.f32.mrf.mxu0
    %v1020 = vadd.f32 %v252, %v1019
    %1021 = vdwg.mxu0
    %v1022 = vxor.u32 %v1018, 2147483648
    %v1023 = vxor.u32 %v1020, 2147483648
    %v1024 = vmul.f32 %v1022, 1.442695
    %v1025 = vpow.pop %v1024
    %v1026 = vmul.f32 %v1023, 1.442695
    %v1027 = vpow.pop %v1026
    %v1028 = vadd.f32 %v1025, 1.0
    %v1029 = vadd.f32 %v1027, 1.0
    %v1030 = vrcp.pop %v1028
    %v1031 = vmul.f32 1.0, %v1030
    %v1032 = vrcp.pop %v1029
    %v1033 = vmul.f32 1.0, %v1032
    %v1034 = vmul.f32 %v1033, 2.0
    %v1035 = vsub.f32 %v1034, 1.0
    %v1036 = vmul.f32 %v1031, %v845
    %v1037 = vmul.f32 %v1031, %v1035
    %1039 = vrot.lane.b32.xlu0 %v1037, 64
    %v1040 = vpop.permute.xlu0 %1039
    %v1042 = vadd.f32 %v1036, %v1040
    %v1043 = vtanh.pop %v1042
    %v1044 = vmul.f32 %v1033, %v1043
    %v1045 = vsel %vm255, %v948, 0
    %1047 = vmatprep.subr.mxu0 0.0
    %1048 = vmatpush1.msra.mxu0 0.0
    %1049 = vmatprep.subr.mxu0 0.0
    %1050 = vmatpush1.msra.mxu0 0.0
    %1051 = vmatprep.subr.mxu0 0.0
    %1052 = vmatpush1.msra.mxu0 0.0
    %1053 = vmatprep.subr.mxu0 0.0
    %1054 = vmatpush1.msra.mxu0 0.0
    %1055 = vmatprep.subr.mxu0 0.0
    %1056 = vmatpush1.msra.mxu0 0.0
    %1057 = vmatprep.subr.mxu0 0.0
    %1058 = vmatpush1.msra.mxu0 0.0
    %1059 = vmatprep.subr.mxu0 0.0
    %1060 = vmatpush1.msra.mxu0 0.0
    %1061 = vmatprep.subr.mxu0 0.0
    %1062 = vmatpush1.msra.mxu0 0.0
    %1063 = vmatprep.subr.mxu0 %v50
    %1064 = vmatpush1.msra.mxu0 %v49
    %1065 = vmatprep.subr.mxu0 %v48
    %1066 = vmatpush1.msra.mxu0 %v47
    %1067 = vmatprep.subr.mxu0 %v46
    %1068 = vmatpush1.msra.mxu0 %v45
    %1069 = vmatprep.subr.mxu0 %v44
    %1070 = vmatpush1.msra.mxu0 %v43
    %1071 = vmatprep.subr.mxu0 %v42
    %1072 = vmatpush1.msra.mxu0 %v41
    %1073 = vmatprep.subr.mxu0 %v40
    %1074 = vmatpush1.msra.mxu0 %v39
    %1075 = vmatprep.subr.mxu0 %v38
    %1076 = vmatpush1.msra.mxu0 %v37
    %1077 = vmatprep.subr.mxu0 %v36
    %1078 = vmatpush1.msra.mxu0 %v35
    %1079 = vmatprep.subr.mxu0 0.0
    %1080 = vmatpush2.msra.mxu0 0.0
    %1081 = vmatprep.subr.mxu0 0.0
    %1082 = vmatpush2.msra.mxu0 0.0
    %1083 = vmatprep.subr.mxu0 0.0
    %1084 = vmatpush2.msra.mxu0 0.0
    %1085 = vmatprep.subr.mxu0 0.0
    %1086 = vmatpush2.msra.mxu0 0.0
    %1087 = vmatprep.subr.mxu0 0.0
    %1088 = vmatpush2.msra.mxu0 0.0
    %1089 = vmatprep.subr.mxu0 0.0
    %1090 = vmatpush2.msra.mxu0 0.0
    %1091 = vmatprep.subr.mxu0 0.0
    %1092 = vmatpush2.msra.mxu0 0.0
    %1093 = vmatprep.subr.mxu0 0.0
    %1094 = vmatpush2.msra.mxu0 0.0
    %1095 = vmatprep.subr.mxu0 0.0
    %1096 = vmatpush2.msra.mxu0 0.0
    %1097 = vmatprep.subr.mxu0 0.0
    %1098 = vmatpush2.msra.mxu0 0.0
    %1099 = vmatprep.subr.mxu0 0.0
    %1100 = vmatpush2.msra.mxu0 0.0
    %1101 = vmatprep.subr.mxu0 0.0
    %1102 = vmatpush2.msra.mxu0 0.0
    %1103 = vmatprep.subr.mxu0 0.0
    %1104 = vmatpush2.msra.mxu0 0.0
    %1105 = vmatprep.subr.mxu0 0.0
    %1106 = vmatpush2.msra.mxu0 0.0
    %1107 = vmatprep.subr.mxu0 0.0
    %1108 = vmatpush2.msra.mxu0 0.0
    %1109 = vmatprep.subr.mxu0 0.0
    %1110 = vmatpush2.msra.mxu0 0.0
    %1111 = vmatprep.mubr.f32.mxu0 0.0
    %1112 = vmatmul.mubr.f32.gmra.mxu0 %v1045
    %v1113 = vpop.f32.mrf.mxu0
    %v1114 = vadd.f32 0.0, %v1113
    %v1115 = vpop.f32.mrf.mxu0
    %v1116 = vadd.f32 0.0, %v1115
    %1117 = vdwg.mxu0
    %v1118 = vadd.f32 %v222, %v1114
    %v1119 = vadd.f32 %v224, %v1116
    %v1120 = vxor.u32 %v1118, 2147483648
    %v1121 = vxor.u32 %v1119, 2147483648
    %v1122 = vmul.f32 %v1120, 1.442695
    %v1123 = vpow.pop %v1122
    %v1124 = vmul.f32 %v1121, 1.442695
    %v1125 = vpow.pop %v1124
    %v1126 = vadd.f32 %v1123, 1.0
    %v1127 = vadd.f32 %v1125, 1.0
    %v1128 = vrcp.pop %v1126
    %v1129 = vmul.f32 1.0, %v1128
    %v1130 = vrcp.pop %v1127
    %v1131 = vmul.f32 1.0, %v1130
    %v1132 = vmul.f32 %v1131, 2.0
    %v1133 = vsub.f32 %v1132, 1.0
    %v1134 = vmul.f32 %v1129, %v943
    %v1135 = vmul.f32 %v1129, %v1133
    %1137 = vrot.lane.b32.xlu0 %v1135, 64
    %v1138 = vpop.permute.xlu0 %1137
    %v1140 = vadd.f32 %v1134, %v1138
    %v1141 = vtanh.pop %v1140
    %v1142 = vmul.f32 %v1131, %v1141
    %1144 = vrot.lane.b32.xlu0 %v1142, 64
    %v1145 = vpop.permute.xlu0 %1144
    %v1147 = vsel %vm255, %v1145, %v1044
    %1148 = vmatprep.subr.mxu0 %v82
    %1149 = vmatpush1.msra.mxu0 %v81
    %1150 = vmatprep.subr.mxu0 %v80
    %1151 = vmatpush1.msra.mxu0 %v79
    %1152 = vmatprep.subr.mxu0 %v78
    %1153 = vmatpush1.msra.mxu0 %v77
    %1154 = vmatprep.subr.mxu0 %v76
    %1155 = vmatpush1.msra.mxu0 %v75
    %1156 = vmatprep.subr.mxu0 %v74
    %1157 = vmatpush1.msra.mxu0 %v73
    %1158 = vmatprep.subr.mxu0 %v72
    %1159 = vmatpush1.msra.mxu0 %v71
    %1160 = vmatprep.subr.mxu0 %v70
    %1161 = vmatpush1.msra.mxu0 %v69
    %1162 = vmatprep.subr.mxu0 %v68
    %1163 = vmatpush1.msra.mxu0 %v67
    %1164 = vmatprep.subr.mxu0 %v66
    %1165 = vmatpush1.msra.mxu0 %v65
    %1166 = vmatprep.subr.mxu0 %v64
    %1167 = vmatpush1.msra.mxu0 %v63
    %1168 = vmatprep.subr.mxu0 %v62
    %1169 = vmatpush1.msra.mxu0 %v61
    %1170 = vmatprep.subr.mxu0 %v60
    %1171 = vmatpush1.msra.mxu0 %v59
    %1172 = vmatprep.subr.mxu0 %v58
    %1173 = vmatpush1.msra.mxu0 %v57
    %1174 = vmatprep.subr.mxu0 %v56
    %1175 = vmatpush1.msra.mxu0 %v55
    %1176 = vmatprep.subr.mxu0 %v54
    %1177 = vmatpush1.msra.mxu0 %v53
    %1178 = vmatprep.subr.mxu0 %v52
    %1179 = vmatpush1.msra.mxu0 %v51
    %1180 = vmatprep.subr.mxu0 0.0
    %1181 = vmatpush2.msra.mxu0 0.0
    %1182 = vmatprep.subr.mxu0 0.0
    %1183 = vmatpush2.msra.mxu0 0.0
    %1184 = vmatprep.subr.mxu0 0.0
    %1185 = vmatpush2.msra.mxu0 0.0
    %1186 = vmatprep.subr.mxu0 0.0
    %1187 = vmatpush2.msra.mxu0 0.0
    %1188 = vmatprep.subr.mxu0 0.0
    %1189 = vmatpush2.msra.mxu0 0.0
    %1190 = vmatprep.subr.mxu0 0.0
    %1191 = vmatpush2.msra.mxu0 0.0
    %1192 = vmatprep.subr.mxu0 0.0
    %1193 = vmatpush2.msra.mxu0 0.0
    %1194 = vmatprep.subr.mxu0 0.0
    %1195 = vmatpush2.msra.mxu0 0.0
    %1196 = vmatprep.subr.mxu0 0.0
    %1197 = vmatpush2.msra.mxu0 0.0
    %1198 = vmatprep.subr.mxu0 0.0
    %1199 = vmatpush2.msra.mxu0 0.0
    %1200 = vmatprep.subr.mxu0 0.0
    %1201 = vmatpush2.msra.mxu0 0.0
    %1202 = vmatprep.subr.mxu0 0.0
    %1203 = vmatpush2.msra.mxu0 0.0
    %1204 = vmatprep.subr.mxu0 0.0
    %1205 = vmatpush2.msra.mxu0 0.0
    %1206 = vmatprep.subr.mxu0 0.0
    %1207 = vmatpush2.msra.mxu0 0.0
    %1208 = vmatprep.subr.mxu0 0.0
    %1209 = vmatpush2.msra.mxu0 0.0
    %1210 = vmatprep.subr.mxu0 0.0
    %1211 = vmatpush2.msra.mxu0 0.0
    %1212 = vmatprep.mubr.f32.mxu0 0.0
    %1213 = vmatmul.mubr.f32.gmra.mxu0 %v1147
    %v1214 = vpop.f32.mrf.mxu0
    %v1215 = vadd.f32 %v248, %v1214
    %v1216 = vpop.f32.mrf.mxu0
    %v1217 = vadd.f32 %v252, %v1216
    %1218 = vdwg.mxu0
    %v1219 = vxor.u32 %v1215, 2147483648
    %v1220 = vxor.u32 %v1217, 2147483648
    %v1221 = vmul.f32 %v1219, 1.442695
    %v1222 = vpow.pop %v1221
    %v1223 = vmul.f32 %v1220, 1.442695
    %v1224 = vpow.pop %v1223
    %v1225 = vadd.f32 %v1222, 1.0
    %v1226 = vadd.f32 %v1224, 1.0
    %v1227 = vrcp.pop %v1225
    %v1228 = vmul.f32 1.0, %v1227
    %v1229 = vrcp.pop %v1226
    %v1230 = vmul.f32 1.0, %v1229
    %v1231 = vmul.f32 %v1230, 2.0
    %v1232 = vsub.f32 %v1231, 1.0
    %v1233 = vmul.f32 %v1228, %v1042
    %v1234 = vmul.f32 %v1228, %v1232
    %1236 = vrot.lane.b32.xlu0 %v1234, 64
    %v1237 = vpop.permute.xlu0 %1236
    %v1239 = vadd.f32 %v1233, %v1237
    %v1240 = vtanh.pop %v1239
    %v1241 = vmul.f32 %v1230, %v1240
    %v1242 = vsel %vm255, %v1145, 0
    %1244 = vmatprep.subr.mxu0 0.0
    %1245 = vmatpush1.msra.mxu0 0.0
    %1246 = vmatprep.subr.mxu0 0.0
    %1247 = vmatpush1.msra.mxu0 0.0
    %1248 = vmatprep.subr.mxu0 0.0
    %1249 = vmatpush1.msra.mxu0 0.0
    %1250 = vmatprep.subr.mxu0 0.0
    %1251 = vmatpush1.msra.mxu0 0.0
    %1252 = vmatprep.subr.mxu0 0.0
    %1253 = vmatpush1.msra.mxu0 0.0
    %1254 = vmatprep.subr.mxu0 0.0
    %1255 = vmatpush1.msra.mxu0 0.0
    %1256 = vmatprep.subr.mxu0 0.0
    %1257 = vmatpush1.msra.mxu0 0.0
    %1258 = vmatprep.subr.mxu0 0.0
    %1259 = vmatpush1.msra.mxu0 0.0
    %1260 = vmatprep.subr.mxu0 %v50
    %1261 = vmatpush1.msra.mxu0 %v49
    %1262 = vmatprep.subr.mxu0 %v48
    %1263 = vmatpush1.msra.mxu0 %v47
    %1264 = vmatprep.subr.mxu0 %v46
    %1265 = vmatpush1.msra.mxu0 %v45
    %1266 = vmatprep.subr.mxu0 %v44
    %1267 = vmatpush1.msra.mxu0 %v43
    %1268 = vmatprep.subr.mxu0 %v42
    %1269 = vmatpush1.msra.mxu0 %v41
    %1270 = vmatprep.subr.mxu0 %v40
    %1271 = vmatpush1.msra.mxu0 %v39
    %1272 = vmatprep.subr.mxu0 %v38
    %1273 = vmatpush1.msra.mxu0 %v37
    %1274 = vmatprep.subr.mxu0 %v36
    %1275 = vmatpush1.msra.mxu0 %v35
    %1276 = vmatprep.subr.mxu0 0.0
    %1277 = vmatpush2.msra.mxu0 0.0
    %1278 = vmatprep.subr.mxu0 0.0
    %1279 = vmatpush2.msra.mxu0 0.0
    %1280 = vmatprep.subr.mxu0 0.0
    %1281 = vmatpush2.msra.mxu0 0.0
    %1282 = vmatprep.subr.mxu0 0.0
    %1283 = vmatpush2.msra.mxu0 0.0
    %1284 = vmatprep.subr.mxu0 0.0
    %1285 = vmatpush2.msra.mxu0 0.0
    %1286 = vmatprep.subr.mxu0 0.0
    %1287 = vmatpush2.msra.mxu0 0.0
    %1288 = vmatprep.subr.mxu0 0.0
    %1289 = vmatpush2.msra.mxu0 0.0
    %1290 = vmatprep.subr.mxu0 0.0
    %1291 = vmatpush2.msra.mxu0 0.0
    %1292 = vmatprep.subr.mxu0 0.0
    %1293 = vmatpush2.msra.mxu0 0.0
    %1294 = vmatprep.subr.mxu0 0.0
    %1295 = vmatpush2.msra.mxu0 0.0
    %1296 = vmatprep.subr.mxu0 0.0
    %1297 = vmatpush2.msra.mxu0 0.0
    %1298 = vmatprep.subr.mxu0 0.0
    %1299 = vmatpush2.msra.mxu0 0.0
    %1300 = vmatprep.subr.mxu0 0.0
    %1301 = vmatpush2.msra.mxu0 0.0
    %1302 = vmatprep.subr.mxu0 0.0
    %1303 = vmatpush2.msra.mxu0 0.0
    %1304 = vmatprep.subr.mxu0 0.0
    %1305 = vmatpush2.msra.mxu0 0.0
    %1306 = vmatprep.subr.mxu0 0.0
    %1307 = vmatpush2.msra.mxu0 0.0
    %1308 = vmatprep.mubr.f32.mxu0 0.0
    %1309 = vmatmul.mubr.f32.gmra.mxu0 %v1242
    %v1310 = vpop.f32.mrf.mxu0
    %v1311 = vadd.f32 0.0, %v1310
    %v1312 = vpop.f32.mrf.mxu0
    %v1313 = vadd.f32 0.0, %v1312
    %1314 = vdwg.mxu0
    %v1315 = vadd.f32 %v228, %v1311
    %v1316 = vadd.f32 %v230, %v1313
    %v1317 = vxor.u32 %v1315, 2147483648
    %v1318 = vxor.u32 %v1316, 2147483648
    %v1319 = vmul.f32 %v1317, 1.442695
    %v1320 = vpow.pop %v1319
    %v1321 = vmul.f32 %v1318, 1.442695
    %v1322 = vpow.pop %v1321
    %v1323 = vadd.f32 %v1320, 1.0
    %v1324 = vadd.f32 %v1322, 1.0
    %v1325 = vrcp.pop %v1323
    %v1326 = vmul.f32 1.0, %v1325
    %v1327 = vrcp.pop %v1324
    %v1328 = vmul.f32 1.0, %v1327
    %v1329 = vmul.f32 %v1328, 2.0
    %v1330 = vsub.f32 %v1329, 1.0
    %v1331 = vmul.f32 %v1326, %v1140
    %v1332 = vmul.f32 %v1326, %v1330
    %1334 = vrot.lane.b32.xlu0 %v1332, 64
    %v1335 = vpop.permute.xlu0 %1334
    %v1337 = vadd.f32 %v1331, %v1335
    %v1338 = vtanh.pop %v1337
    %v1339 = vmul.f32 %v1328, %v1338
    %1341 = vrot.lane.b32.xlu0 %v1339, 64
    %v1342 = vpop.permute.xlu0 %1341
    %v1344 = vsel %vm255, %v1342, %v1241
    %1345 = vmatprep.subr.mxu0 %v82
    %1346 = vmatpush1.msra.mxu0 %v81
    %1347 = vmatprep.subr.mxu0 %v80
    %1348 = vmatpush1.msra.mxu0 %v79
    %1349 = vmatprep.subr.mxu0 %v78
    %1350 = vmatpush1.msra.mxu0 %v77
    %1351 = vmatprep.subr.mxu0 %v76
    %1352 = vmatpush1.msra.mxu0 %v75
    %1353 = vmatprep.subr.mxu0 %v74
    %1354 = vmatpush1.msra.mxu0 %v73
    %1355 = vmatprep.subr.mxu0 %v72
    %1356 = vmatpush1.msra.mxu0 %v71
    %1357 = vmatprep.subr.mxu0 %v70
    %1358 = vmatpush1.msra.mxu0 %v69
    %1359 = vmatprep.subr.mxu0 %v68
    %1360 = vmatpush1.msra.mxu0 %v67
    %1361 = vmatprep.subr.mxu0 %v66
    %1362 = vmatpush1.msra.mxu0 %v65
    %1363 = vmatprep.subr.mxu0 %v64
    %1364 = vmatpush1.msra.mxu0 %v63
    %1365 = vmatprep.subr.mxu0 %v62
    %1366 = vmatpush1.msra.mxu0 %v61
    %1367 = vmatprep.subr.mxu0 %v60
    %1368 = vmatpush1.msra.mxu0 %v59
    %1369 = vmatprep.subr.mxu0 %v58
    %1370 = vmatpush1.msra.mxu0 %v57
    %1371 = vmatprep.subr.mxu0 %v56
    %1372 = vmatpush1.msra.mxu0 %v55
    %1373 = vmatprep.subr.mxu0 %v54
    %1374 = vmatpush1.msra.mxu0 %v53
    %1375 = vmatprep.subr.mxu0 %v52
    %1376 = vmatpush1.msra.mxu0 %v51
    %1377 = vmatprep.subr.mxu0 0.0
    %1378 = vmatpush2.msra.mxu0 0.0
    %1379 = vmatprep.subr.mxu0 0.0
    %1380 = vmatpush2.msra.mxu0 0.0
    %1381 = vmatprep.subr.mxu0 0.0
    %1382 = vmatpush2.msra.mxu0 0.0
    %1383 = vmatprep.subr.mxu0 0.0
    %1384 = vmatpush2.msra.mxu0 0.0
    %1385 = vmatprep.subr.mxu0 0.0
    %1386 = vmatpush2.msra.mxu0 0.0
    %1387 = vmatprep.subr.mxu0 0.0
    %1388 = vmatpush2.msra.mxu0 0.0
    %1389 = vmatprep.subr.mxu0 0.0
    %1390 = vmatpush2.msra.mxu0 0.0
    %1391 = vmatprep.subr.mxu0 0.0
    %1392 = vmatpush2.msra.mxu0 0.0
    %1393 = vmatprep.subr.mxu0 0.0
    %1394 = vmatpush2.msra.mxu0 0.0
    %1395 = vmatprep.subr.mxu0 0.0
    %1396 = vmatpush2.msra.mxu0 0.0
    %1397 = vmatprep.subr.mxu0 0.0
    %1398 = vmatpush2.msra.mxu0 0.0
    %1399 = vmatprep.subr.mxu0 0.0
    %1400 = vmatpush2.msra.mxu0 0.0
    %1401 = vmatprep.subr.mxu0 0.0
    %1402 = vmatpush2.msra.mxu0 0.0
    %1403 = vmatprep.subr.mxu0 0.0
    %1404 = vmatpush2.msra.mxu0 0.0
    %1405 = vmatprep.subr.mxu0 0.0
    %1406 = vmatpush2.msra.mxu0 0.0
    %1407 = vmatprep.subr.mxu0 0.0
    %1408 = vmatpush2.msra.mxu0 0.0
    %1409 = vmatprep.mubr.f32.mxu0 0.0
    %1410 = vmatmul.mubr.f32.gmra.mxu0 %v1344
    %v1411 = vpop.f32.mrf.mxu0
    %v1412 = vadd.f32 %v248, %v1411
    %v1413 = vpop.f32.mrf.mxu0
    %v1414 = vadd.f32 %v252, %v1413
    %1415 = vdwg.mxu0
    %v1416 = vxor.u32 %v1412, 2147483648
    %v1417 = vxor.u32 %v1414, 2147483648
    %v1418 = vmul.f32 %v1416, 1.442695
    %v1419 = vpow.pop %v1418
    %v1420 = vmul.f32 %v1417, 1.442695
    %v1421 = vpow.pop %v1420
    %v1422 = vadd.f32 %v1419, 1.0
    %v1423 = vadd.f32 %v1421, 1.0
    %v1424 = vrcp.pop %v1422
    %v1425 = vmul.f32 1.0, %v1424
    %v1426 = vrcp.pop %v1423
    %v1427 = vmul.f32 1.0, %v1426
    %v1428 = vmul.f32 %v1427, 2.0
    %v1429 = vsub.f32 %v1428, 1.0
    %v1430 = vmul.f32 %v1425, %v1239
    %v1431 = vmul.f32 %v1425, %v1429
    %1433 = vrot.lane.b32.xlu0 %v1431, 64
    %v1434 = vpop.permute.xlu0 %1433
    %v1436 = vadd.f32 %v1430, %v1434
    %v1437 = vtanh.pop %v1436
    %v1438 = vmul.f32 %v1427, %v1437
    %v1439 = vsel %vm255, %v1342, 0
    %1441 = vmatprep.subr.mxu0 0.0
    %1442 = vmatpush1.msra.mxu0 0.0
    %1443 = vmatprep.subr.mxu0 0.0
    %1444 = vmatpush1.msra.mxu0 0.0
    %1445 = vmatprep.subr.mxu0 0.0
    %1446 = vmatpush1.msra.mxu0 0.0
    %1447 = vmatprep.subr.mxu0 0.0
    %1448 = vmatpush1.msra.mxu0 0.0
    %1449 = vmatprep.subr.mxu0 0.0
    %1450 = vmatpush1.msra.mxu0 0.0
    %1451 = vmatprep.subr.mxu0 0.0
    %1452 = vmatpush1.msra.mxu0 0.0
    %1453 = vmatprep.subr.mxu0 0.0
    %1454 = vmatpush1.msra.mxu0 0.0
    %1455 = vmatprep.subr.mxu0 0.0
    %1456 = vmatpush1.msra.mxu0 0.0
    %1457 = vmatprep.subr.mxu0 %v50
    %1458 = vmatpush1.msra.mxu0 %v49
    %1459 = vmatprep.subr.mxu0 %v48
    %1460 = vmatpush1.msra.mxu0 %v47
    %1461 = vmatprep.subr.mxu0 %v46
    %1462 = vmatpush1.msra.mxu0 %v45
    %1463 = vmatprep.subr.mxu0 %v44
    %1464 = vmatpush1.msra.mxu0 %v43
    %1465 = vmatprep.subr.mxu0 %v42
    %1466 = vmatpush1.msra.mxu0 %v41
    %1467 = vmatprep.subr.mxu0 %v40
    %1468 = vmatpush1.msra.mxu0 %v39
    %1469 = vmatprep.subr.mxu0 %v38
    %1470 = vmatpush1.msra.mxu0 %v37
    %1471 = vmatprep.subr.mxu0 %v36
    %1472 = vmatpush1.msra.mxu0 %v35
    %1473 = vmatprep.subr.mxu0 0.0
    %1474 = vmatpush2.msra.mxu0 0.0
    %1475 = vmatprep.subr.mxu0 0.0
    %1476 = vmatpush2.msra.mxu0 0.0
    %1477 = vmatprep.subr.mxu0 0.0
    %1478 = vmatpush2.msra.mxu0 0.0
    %1479 = vmatprep.subr.mxu0 0.0
    %1480 = vmatpush2.msra.mxu0 0.0
    %1481 = vmatprep.subr.mxu0 0.0
    %1482 = vmatpush2.msra.mxu0 0.0
    %1483 = vmatprep.subr.mxu0 0.0
    %1484 = vmatpush2.msra.mxu0 0.0
    %1485 = vmatprep.subr.mxu0 0.0
    %1486 = vmatpush2.msra.mxu0 0.0
    %1487 = vmatprep.subr.mxu0 0.0
    %1488 = vmatpush2.msra.mxu0 0.0
    %1489 = vmatprep.subr.mxu0 0.0
    %1490 = vmatpush2.msra.mxu0 0.0
    %1491 = vmatprep.subr.mxu0 0.0
    %1492 = vmatpush2.msra.mxu0 0.0
    %1493 = vmatprep.subr.mxu0 0.0
    %1494 = vmatpush2.msra.mxu0 0.0
    %1495 = vmatprep.subr.mxu0 0.0
    %1496 = vmatpush2.msra.mxu0 0.0
    %1497 = vmatprep.subr.mxu0 0.0
    %1498 = vmatpush2.msra.mxu0 0.0
    %1499 = vmatprep.subr.mxu0 0.0
    %1500 = vmatpush2.msra.mxu0 0.0
    %1501 = vmatprep.subr.mxu0 0.0
    %1502 = vmatpush2.msra.mxu0 0.0
    %1503 = vmatprep.subr.mxu0 0.0
    %1504 = vmatpush2.msra.mxu0 0.0
    %1505 = vmatprep.mubr.f32.mxu0 0.0
    %1506 = vmatmul.mubr.f32.gmra.mxu0 %v1439
    %v1507 = vpop.f32.mrf.mxu0
    %v1508 = vadd.f32 0.0, %v1507
    %v1509 = vpop.f32.mrf.mxu0
    %v1510 = vadd.f32 0.0, %v1509
    %1511 = vdwg.mxu0
    %v1512 = vadd.f32 %v234, %v1508
    %v1513 = vadd.f32 %v236, %v1510
    %v1514 = vxor.u32 %v1512, 2147483648
    %v1515 = vxor.u32 %v1513, 2147483648
    %v1516 = vmul.f32 %v1514, 1.442695
    %v1517 = vpow.pop %v1516
    %v1518 = vmul.f32 %v1515, 1.442695
    %v1519 = vpow.pop %v1518
    %v1520 = vadd.f32 %v1517, 1.0
    %v1521 = vadd.f32 %v1519, 1.0
    %v1522 = vrcp.pop %v1520
    %v1523 = vmul.f32 1.0, %v1522
    %v1524 = vrcp.pop %v1521
    %v1525 = vmul.f32 1.0, %v1524
    %v1526 = vmul.f32 %v1525, 2.0
    %v1527 = vsub.f32 %v1526, 1.0
    %v1528 = vmul.f32 %v1523, %v1337
    %v1529 = vmul.f32 %v1523, %v1527
    %1531 = vrot.lane.b32.xlu0 %v1529, 64
    %v1532 = vpop.permute.xlu0 %1531
    %v1534 = vadd.f32 %v1528, %v1532
    %v1535 = vtanh.pop %v1534
    %v1536 = vmul.f32 %v1525, %v1535
    %1538 = vrot.lane.b32.xlu0 %v1536, 64
    %v1539 = vpop.permute.xlu0 %1538
    %v1541 = vsel %vm255, %v1539, %v1438
    %1542 = vmatprep.subr.mxu0 %v82
    %1543 = vmatpush1.msra.mxu0 %v81
    %1544 = vmatprep.subr.mxu0 %v80
    %1545 = vmatpush1.msra.mxu0 %v79
    %1546 = vmatprep.subr.mxu0 %v78
    %1547 = vmatpush1.msra.mxu0 %v77
    %1548 = vmatprep.subr.mxu0 %v76
    %1549 = vmatpush1.msra.mxu0 %v75
    %1550 = vmatprep.subr.mxu0 %v74
    %1551 = vmatpush1.msra.mxu0 %v73
    %1552 = vmatprep.subr.mxu0 %v72
    %1553 = vmatpush1.msra.mxu0 %v71
    %1554 = vmatprep.subr.mxu0 %v70
    %1555 = vmatpush1.msra.mxu0 %v69
    %1556 = vmatprep.subr.mxu0 %v68
    %1557 = vmatpush1.msra.mxu0 %v67
    %1558 = vmatprep.subr.mxu0 %v66
    %1559 = vmatpush1.msra.mxu0 %v65
    %1560 = vmatprep.subr.mxu0 %v64
    %1561 = vmatpush1.msra.mxu0 %v63
    %1562 = vmatprep.subr.mxu0 %v62
    %1563 = vmatpush1.msra.mxu0 %v61
    %1564 = vmatprep.subr.mxu0 %v60
    %1565 = vmatpush1.msra.mxu0 %v59
    %1566 = vmatprep.subr.mxu0 %v58
    %1567 = vmatpush1.msra.mxu0 %v57
    %1568 = vmatprep.subr.mxu0 %v56
    %1569 = vmatpush1.msra.mxu0 %v55
    %1570 = vmatprep.subr.mxu0 %v54
    %1571 = vmatpush1.msra.mxu0 %v53
    %1572 = vmatprep.subr.mxu0 %v52
    %1573 = vmatpush1.msra.mxu0 %v51
    %1574 = vmatprep.subr.mxu0 0.0
    %1575 = vmatpush2.msra.mxu0 0.0
    %1576 = vmatprep.subr.mxu0 0.0
    %1577 = vmatpush2.msra.mxu0 0.0
    %1578 = vmatprep.subr.mxu0 0.0
    %1579 = vmatpush2.msra.mxu0 0.0
    %1580 = vmatprep.subr.mxu0 0.0
    %1581 = vmatpush2.msra.mxu0 0.0
    %1582 = vmatprep.subr.mxu0 0.0
    %1583 = vmatpush2.msra.mxu0 0.0
    %1584 = vmatprep.subr.mxu0 0.0
    %1585 = vmatpush2.msra.mxu0 0.0
    %1586 = vmatprep.subr.mxu0 0.0
    %1587 = vmatpush2.msra.mxu0 0.0
    %1588 = vmatprep.subr.mxu0 0.0
    %1589 = vmatpush2.msra.mxu0 0.0
    %1590 = vmatprep.subr.mxu0 0.0
    %1591 = vmatpush2.msra.mxu0 0.0
    %1592 = vmatprep.subr.mxu0 0.0
    %1593 = vmatpush2.msra.mxu0 0.0
    %1594 = vmatprep.subr.mxu0 0.0
    %1595 = vmatpush2.msra.mxu0 0.0
    %1596 = vmatprep.subr.mxu0 0.0
    %1597 = vmatpush2.msra.mxu0 0.0
    %1598 = vmatprep.subr.mxu0 0.0
    %1599 = vmatpush2.msra.mxu0 0.0
    %1600 = vmatprep.subr.mxu0 0.0
    %1601 = vmatpush2.msra.mxu0 0.0
    %1602 = vmatprep.subr.mxu0 0.0
    %1603 = vmatpush2.msra.mxu0 0.0
    %1604 = vmatprep.subr.mxu0 0.0
    %1605 = vmatpush2.msra.mxu0 0.0
    %1606 = vmatprep.mubr.f32.mxu0 0.0
    %1607 = vmatmul.mubr.f32.gmra.mxu0 %v1541
    %v1608 = vpop.f32.mrf.mxu0
    %v1609 = vadd.f32 %v248, %v1608
    %v1610 = vpop.f32.mrf.mxu0
    %v1611 = vadd.f32 %v252, %v1610
    %1612 = vdwg.mxu0
    %v1613 = vxor.u32 %v1609, 2147483648
    %v1614 = vxor.u32 %v1611, 2147483648
    %v1615 = vmul.f32 %v1613, 1.442695
    %v1616 = vpow.pop %v1615
    %v1617 = vmul.f32 %v1614, 1.442695
    %v1618 = vpow.pop %v1617
    %v1619 = vadd.f32 %v1616, 1.0
    %v1620 = vadd.f32 %v1618, 1.0
    %v1621 = vrcp.pop %v1619
    %v1622 = vmul.f32 1.0, %v1621
    %v1623 = vrcp.pop %v1620
    %v1624 = vmul.f32 1.0, %v1623
    %v1625 = vmul.f32 %v1624, 2.0
    %v1626 = vsub.f32 %v1625, 1.0
    %v1627 = vmul.f32 %v1622, %v1436
    %v1628 = vmul.f32 %v1622, %v1626
    %1630 = vrot.lane.b32.xlu0 %v1628, 64
    %v1631 = vpop.permute.xlu0 %1630
    %v1633 = vadd.f32 %v1627, %v1631
    %v1634 = vtanh.pop %v1633
    %v1635 = vmul.f32 %v1624, %v1634
    %v1636 = vsel %vm255, %v1539, 0
    %1638 = vmatprep.subr.mxu0 0.0
    %1639 = vmatpush1.msra.mxu0 0.0
    %1640 = vmatprep.subr.mxu0 0.0
    %1641 = vmatpush1.msra.mxu0 0.0
    %1642 = vmatprep.subr.mxu0 0.0
    %1643 = vmatpush1.msra.mxu0 0.0
    %1644 = vmatprep.subr.mxu0 0.0
    %1645 = vmatpush1.msra.mxu0 0.0
    %1646 = vmatprep.subr.mxu0 0.0
    %1647 = vmatpush1.msra.mxu0 0.0
    %1648 = vmatprep.subr.mxu0 0.0
    %1649 = vmatpush1.msra.mxu0 0.0
    %1650 = vmatprep.subr.mxu0 0.0
    %1651 = vmatpush1.msra.mxu0 0.0
    %1652 = vmatprep.subr.mxu0 0.0
    %1653 = vmatpush1.msra.mxu0 0.0
    %1654 = vmatprep.subr.mxu0 %v50
    %1655 = vmatpush1.msra.mxu0 %v49
    %1656 = vmatprep.subr.mxu0 %v48
    %1657 = vmatpush1.msra.mxu0 %v47
    %1658 = vmatprep.subr.mxu0 %v46
    %1659 = vmatpush1.msra.mxu0 %v45
    %1660 = vmatprep.subr.mxu0 %v44
    %1661 = vmatpush1.msra.mxu0 %v43
    %1662 = vmatprep.subr.mxu0 %v42
    %1663 = vmatpush1.msra.mxu0 %v41
    %1664 = vmatprep.subr.mxu0 %v40
    %1665 = vmatpush1.msra.mxu0 %v39
    %1666 = vmatprep.subr.mxu0 %v38
    %1667 = vmatpush1.msra.mxu0 %v37
    %1668 = vmatprep.subr.mxu0 %v36
    %1669 = vmatpush1.msra.mxu0 %v35
    %1670 = vmatprep.subr.mxu0 0.0
    %1671 = vmatpush2.msra.mxu0 0.0
    %1672 = vmatprep.subr.mxu0 0.0
    %1673 = vmatpush2.msra.mxu0 0.0
    %1674 = vmatprep.subr.mxu0 0.0
    %1675 = vmatpush2.msra.mxu0 0.0
    %1676 = vmatprep.subr.mxu0 0.0
    %1677 = vmatpush2.msra.mxu0 0.0
    %1678 = vmatprep.subr.mxu0 0.0
    %1679 = vmatpush2.msra.mxu0 0.0
    %1680 = vmatprep.subr.mxu0 0.0
    %1681 = vmatpush2.msra.mxu0 0.0
    %1682 = vmatprep.subr.mxu0 0.0
    %1683 = vmatpush2.msra.mxu0 0.0
    %1684 = vmatprep.subr.mxu0 0.0
    %1685 = vmatpush2.msra.mxu0 0.0
    %1686 = vmatprep.subr.mxu0 0.0
    %1687 = vmatpush2.msra.mxu0 0.0
    %1688 = vmatprep.subr.mxu0 0.0
    %1689 = vmatpush2.msra.mxu0 0.0
    %1690 = vmatprep.subr.mxu0 0.0
    %1691 = vmatpush2.msra.mxu0 0.0
    %1692 = vmatprep.subr.mxu0 0.0
    %1693 = vmatpush2.msra.mxu0 0.0
    %1694 = vmatprep.subr.mxu0 0.0
    %1695 = vmatpush2.msra.mxu0 0.0
    %1696 = vmatprep.subr.mxu0 0.0
    %1697 = vmatpush2.msra.mxu0 0.0
    %1698 = vmatprep.subr.mxu0 0.0
    %1699 = vmatpush2.msra.mxu0 0.0
    %1700 = vmatprep.subr.mxu0 0.0
    %1701 = vmatpush2.msra.mxu0 0.0
    %1702 = vmatprep.mubr.f32.mxu0 0.0
    %1703 = vmatmul.mubr.f32.gmra.mxu0 %v1636
    %v1704 = vpop.f32.mrf.mxu0
    %v1705 = vadd.f32 0.0, %v1704
    %v1706 = vpop.f32.mrf.mxu0
    %v1707 = vadd.f32 0.0, %v1706
    %1708 = vdwg.mxu0
    %v1709 = vadd.f32 %v240, %v1705
    %v1710 = vadd.f32 %v242, %v1707
    %v1711 = vxor.u32 %v1709, 2147483648
    %v1712 = vxor.u32 %v1710, 2147483648
    %v1713 = vmul.f32 %v1711, 1.442695
    %v1714 = vpow.pop %v1713
    %v1715 = vmul.f32 %v1712, 1.442695
    %v1716 = vpow.pop %v1715
    %v1717 = vadd.f32 %v1714, 1.0
    %v1718 = vadd.f32 %v1716, 1.0
    %v1719 = vrcp.pop %v1717
    %v1720 = vmul.f32 1.0, %v1719
    %v1721 = vrcp.pop %v1718
    %v1722 = vmul.f32 1.0, %v1721
    %v1723 = vmul.f32 %v1722, 2.0
    %v1724 = vsub.f32 %v1723, 1.0
    %v1725 = vmul.f32 %v1720, %v1534
    %v1726 = vmul.f32 %v1720, %v1724
    %1728 = vrot.lane.b32.xlu0 %v1726, 64
    %v1729 = vpop.permute.xlu0 %1728
    %v1731 = vadd.f32 %v1725, %v1729
    %v1732 = vtanh.pop %v1731
    %v1733 = vmul.f32 %v1722, %v1732
    %1735 = vrot.lane.b32.xlu0 %v1733, 64
    %v1736 = vpop.permute.xlu0 %1735
    %v1738 = vsel %vm255, %v1736, %v1635
    %1739 = vmatprep.subr.mxu0 %v82
    %1740 = vmatpush1.msra.mxu0 %v81
    %1741 = vmatprep.subr.mxu0 %v80
    %1742 = vmatpush1.msra.mxu0 %v79
    %1743 = vmatprep.subr.mxu0 %v78
    %1744 = vmatpush1.msra.mxu0 %v77
    %1745 = vmatprep.subr.mxu0 %v76
    %1746 = vmatpush1.msra.mxu0 %v75
    %1747 = vmatprep.subr.mxu0 %v74
    %1748 = vmatpush1.msra.mxu0 %v73
    %1749 = vmatprep.subr.mxu0 %v72
    %1750 = vmatpush1.msra.mxu0 %v71
    %1751 = vmatprep.subr.mxu0 %v70
    %1752 = vmatpush1.msra.mxu0 %v69
    %1753 = vmatprep.subr.mxu0 %v68
    %1754 = vmatpush1.msra.mxu0 %v67
    %1755 = vmatprep.subr.mxu0 %v66
    %1756 = vmatpush1.msra.mxu0 %v65
    %1757 = vmatprep.subr.mxu0 %v64
    %1758 = vmatpush1.msra.mxu0 %v63
    %1759 = vmatprep.subr.mxu0 %v62
    %1760 = vmatpush1.msra.mxu0 %v61
    %1761 = vmatprep.subr.mxu0 %v60
    %1762 = vmatpush1.msra.mxu0 %v59
    %1763 = vmatprep.subr.mxu0 %v58
    %1764 = vmatpush1.msra.mxu0 %v57
    %1765 = vmatprep.subr.mxu0 %v56
    %1766 = vmatpush1.msra.mxu0 %v55
    %1767 = vmatprep.subr.mxu0 %v54
    %1768 = vmatpush1.msra.mxu0 %v53
    %1769 = vmatprep.subr.mxu0 %v52
    %1770 = vmatpush1.msra.mxu0 %v51
    %1771 = vmatprep.subr.mxu0 0.0
    %1772 = vmatpush2.msra.mxu0 0.0
    %1773 = vmatprep.subr.mxu0 0.0
    %1774 = vmatpush2.msra.mxu0 0.0
    %1775 = vmatprep.subr.mxu0 0.0
    %1776 = vmatpush2.msra.mxu0 0.0
    %1777 = vmatprep.subr.mxu0 0.0
    %1778 = vmatpush2.msra.mxu0 0.0
    %1779 = vmatprep.subr.mxu0 0.0
    %1780 = vmatpush2.msra.mxu0 0.0
    %1781 = vmatprep.subr.mxu0 0.0
    %1782 = vmatpush2.msra.mxu0 0.0
    %1783 = vmatprep.subr.mxu0 0.0
    %1784 = vmatpush2.msra.mxu0 0.0
    %1785 = vmatprep.subr.mxu0 0.0
    %1786 = vmatpush2.msra.mxu0 0.0
    %1787 = vmatprep.subr.mxu0 0.0
    %1788 = vmatpush2.msra.mxu0 0.0
    %1789 = vmatprep.subr.mxu0 0.0
    %1790 = vmatpush2.msra.mxu0 0.0
    %1791 = vmatprep.subr.mxu0 0.0
    %1792 = vmatpush2.msra.mxu0 0.0
    %1793 = vmatprep.subr.mxu0 0.0
    %1794 = vmatpush2.msra.mxu0 0.0
    %1795 = vmatprep.subr.mxu0 0.0
    %1796 = vmatpush2.msra.mxu0 0.0
    %1797 = vmatprep.subr.mxu0 0.0
    %1798 = vmatpush2.msra.mxu0 0.0
    %1799 = vmatprep.subr.mxu0 0.0
    %1800 = vmatpush2.msra.mxu0 0.0
    %1801 = vmatprep.subr.mxu0 0.0
    %1802 = vmatpush2.msra.mxu0 0.0
    %1803 = vmatprep.mubr.f32.mxu0 0.0
    %1804 = vmatmul.mubr.f32.gmra.mxu0 %v1738
    %v1805 = vpop.f32.mrf.mxu0
    %v1806 = vadd.f32 %v248, %v1805
    %v1807 = vpop.f32.mrf.mxu0
    %v1808 = vadd.f32 %v252, %v1807
    %1809 = vdwg.mxu0
    %v1810 = vxor.u32 %v1806, 2147483648
    %v1811 = vxor.u32 %v1808, 2147483648
    %v1812 = vmul.f32 %v1810, 1.442695
    %v1813 = vpow.pop %v1812
    %v1814 = vmul.f32 %v1811, 1.442695
    %v1815 = vpow.pop %v1814
    %v1816 = vadd.f32 %v1813, 1.0
    %v1817 = vadd.f32 %v1815, 1.0
    %v1818 = vrcp.pop %v1816
    %v1819 = vmul.f32 1.0, %v1818
    %v1820 = vrcp.pop %v1817
    %v1821 = vmul.f32 1.0, %v1820
    %v1822 = vmul.f32 %v1821, 2.0
    %v1823 = vsub.f32 %v1822, 1.0
    %v1824 = vmul.f32 %v1819, %v1633
    %v1825 = vmul.f32 %v1819, %v1823
    %1827 = vrot.lane.b32.xlu0 %v1825, 64
    %v1828 = vpop.permute.xlu0 %1827
    %v1830 = vadd.f32 %v1824, %v1828
    %v1831 = vtanh.pop %v1830
    %v1832 = vmul.f32 %v1821, %v1831
    %v1833 = vld [vmem:[%s3] sm:$0xff]
    %v1834 = vld [vmem:[%s3 + $0x8] sm:$0xff]
    %v1835 = vld [vmem:[%s3 + $0x10] sm:$0xff]
    %v1836 = vld [vmem:[%s3 + $0x18] sm:$0xff]
    %v1837 = vld [vmem:[%s3 + $0x20] sm:$0xff]
    %v1838 = vld [vmem:[%s3 + $0x28] sm:$0xff]
    %v1839 = vld [vmem:[%s3 + $0x30] sm:$0xff]
    %v1840 = vld [vmem:[%s3 + $0x38] sm:$0xff]
    %v1841 = vld [vmem:[%s3 + $0x40] sm:$0xff]
    %v1842 = vld [vmem:[%s3 + $0x48] sm:$0x1]
    %v1843 = vld [vmem:[%s1] sm:$0xff]
    %vm1844 = vcmask 64512
    %v1846 = vsel %vm1844, %v1843, 0
    %1848 = vmatprep.subr.mxu0 0.0
    %1849 = vmatpush1.msra.mxu0 0.0
    %1850 = vmatprep.subr.mxu0 0.0
    %1851 = vmatpush1.msra.mxu0 0.0
    %1852 = vmatprep.subr.mxu0 0.0
    %1853 = vmatpush1.msra.mxu0 0.0
    %1854 = vmatprep.subr.mxu0 0.0
    %1855 = vmatpush1.msra.mxu0 0.0
    %1856 = vmatprep.subr.mxu0 0.0
    %1857 = vmatpush1.msra.mxu0 0.0
    %1858 = vmatprep.subr.mxu0 0.0
    %1859 = vmatpush1.msra.mxu0 0.0
    %1860 = vmatprep.subr.mxu0 0.0
    %1861 = vmatpush1.msra.mxu0 0.0
    %1862 = vmatprep.subr.mxu0 0.0
    %1863 = vmatpush1.msra.mxu0 0.0
    %1864 = vmatprep.subr.mxu0 0.0
    %1865 = vmatpush1.msra.mxu0 0.0
    %1866 = vmatprep.subr.mxu0 0.0
    %1867 = vmatpush1.msra.mxu0 0.0
    %1868 = vmatprep.subr.mxu0 0.0
    %1869 = vmatpush1.msra.mxu0 0.0
    %1870 = vmatprep.subr.mxu0 0.0
    %1871 = vmatpush1.msra.mxu0 0.0
    %1872 = vmatprep.subr.mxu0 0.0
    %1873 = vmatpush1.msra.mxu0 0.0
    %1874 = vmatprep.subr.mxu0 0.0
    %1875 = vmatpush1.msra.mxu0 0.0
    %1876 = vmatprep.subr.mxu0 0.0
    %1877 = vmatpush1.msra.mxu0 0.0
    %1878 = vmatprep.subr.mxu0 0.0
    %1879 = vmatpush1.msra.mxu0 %v1841
    %1880 = vmatprep.subr.mxu0 0.0
    %1881 = vmatpush2.msra.mxu0 0.0
    %1882 = vmatprep.subr.mxu0 0.0
    %1883 = vmatpush2.msra.mxu0 0.0
    %1884 = vmatprep.subr.mxu0 0.0
    %1885 = vmatpush2.msra.mxu0 0.0
    %1886 = vmatprep.subr.mxu0 0.0
    %1887 = vmatpush2.msra.mxu0 0.0
    %1888 = vmatprep.subr.mxu0 0.0
    %1889 = vmatpush2.msra.mxu0 0.0
    %1890 = vmatprep.subr.mxu0 0.0
    %1891 = vmatpush2.msra.mxu0 0.0
    %1892 = vmatprep.subr.mxu0 0.0
    %1893 = vmatpush2.msra.mxu0 0.0
    %1894 = vmatprep.subr.mxu0 0.0
    %1895 = vmatpush2.msra.mxu0 0.0
    %1896 = vmatprep.subr.mxu0 0.0
    %1897 = vmatpush2.msra.mxu0 0.0
    %1898 = vmatprep.subr.mxu0 0.0
    %1899 = vmatpush2.msra.mxu0 0.0
    %1900 = vmatprep.subr.mxu0 0.0
    %1901 = vmatpush2.msra.mxu0 0.0
    %1902 = vmatprep.subr.mxu0 0.0
    %1903 = vmatpush2.msra.mxu0 0.0
    %1904 = vmatprep.subr.mxu0 0.0
    %1905 = vmatpush2.msra.mxu0 0.0
    %1906 = vmatprep.subr.mxu0 0.0
    %1907 = vmatpush2.msra.mxu0 0.0
    %1908 = vmatprep.subr.mxu0 0.0
    %1909 = vmatpush2.msra.mxu0 0.0
    %1910 = vmatprep.subr.mxu0 0.0
    %1911 = vmatpush2.msra.mxu0 0.0
    %1912 = vmatprep.mubr.f32.mxu0 0.0
    %1913 = vmatmul.mubr.f32.gmra.mxu0 %v1846
    %v1914 = vpop.f32.mrf.mxu0
    %v1915 = vadd.f32 0.0, %v1914
    %v1916 = vpop.f32.mrf.mxu0
    %1917 = vdwg.mxu0
    %1919 = vrot.lane.b32.xlu0 %v1832, 64
    %v1920 = vpop.permute.xlu0 %1919
    %v1921 = vsel %vm255, %v1920, 0
    %1923 = vmatprep.subr.mxu0 0.0
    %1924 = vmatpush1.msra.mxu0 0.0
    %1925 = vmatprep.subr.mxu0 0.0
    %1926 = vmatpush1.msra.mxu0 0.0
    %1927 = vmatprep.subr.mxu0 0.0
    %1928 = vmatpush1.msra.mxu0 0.0
    %1929 = vmatprep.subr.mxu0 0.0
    %1930 = vmatpush1.msra.mxu0 0.0
    %1931 = vmatprep.subr.mxu0 0.0
    %1932 = vmatpush1.msra.mxu0 0.0
    %1933 = vmatprep.subr.mxu0 0.0
    %1934 = vmatpush1.msra.mxu0 0.0
    %1935 = vmatprep.subr.mxu0 0.0
    %1936 = vmatpush1.msra.mxu0 0.0
    %1937 = vmatprep.subr.mxu0 0.0
    %1938 = vmatpush1.msra.mxu0 0.0
    %1939 = vmatprep.subr.mxu0 0.0
    %1940 = vmatpush1.msra.mxu0 %v1840
    %1941 = vmatprep.subr.mxu0 0.0
    %1942 = vmatpush1.msra.mxu0 %v1839
    %1943 = vmatprep.subr.mxu0 0.0
    %1944 = vmatpush1.msra.mxu0 %v1838
    %1945 = vmatprep.subr.mxu0 0.0
    %1946 = vmatpush1.msra.mxu0 %v1837
    %1947 = vmatprep.subr.mxu0 0.0
    %1948 = vmatpush1.msra.mxu0 %v1836
    %1949 = vmatprep.subr.mxu0 0.0
    %1950 = vmatpush1.msra.mxu0 %v1835
    %1951 = vmatprep.subr.mxu0 0.0
    %1952 = vmatpush1.msra.mxu0 %v1834
    %1953 = vmatprep.subr.mxu0 0.0
    %1954 = vmatpush1.msra.mxu0 %v1833
    %1955 = vmatprep.subr.mxu0 0.0
    %1956 = vmatpush2.msra.mxu0 0.0
    %1957 = vmatprep.subr.mxu0 0.0
    %1958 = vmatpush2.msra.mxu0 0.0
    %1959 = vmatprep.subr.mxu0 0.0
    %1960 = vmatpush2.msra.mxu0 0.0
    %1961 = vmatprep.subr.mxu0 0.0
    %1962 = vmatpush2.msra.mxu0 0.0
    %1963 = vmatprep.subr.mxu0 0.0
    %1964 = vmatpush2.msra.mxu0 0.0
    %1965 = vmatprep.subr.mxu0 0.0
    %1966 = vmatpush2.msra.mxu0 0.0
    %1967 = vmatprep.subr.mxu0 0.0
    %1968 = vmatpush2.msra.mxu0 0.0
    %1969 = vmatprep.subr.mxu0 0.0
    %1970 = vmatpush2.msra.mxu0 0.0
    %1971 = vmatprep.subr.mxu0 0.0
    %1972 = vmatpush2.msra.mxu0 0.0
    %1973 = vmatprep.subr.mxu0 0.0
    %1974 = vmatpush2.msra.mxu0 0.0
    %1975 = vmatprep.subr.mxu0 0.0
    %1976 = vmatpush2.msra.mxu0 0.0
    %1977 = vmatprep.subr.mxu0 0.0
    %1978 = vmatpush2.msra.mxu0 0.0
    %1979 = vmatprep.subr.mxu0 0.0
    %1980 = vmatpush2.msra.mxu0 0.0
    %1981 = vmatprep.subr.mxu0 0.0
    %1982 = vmatpush2.msra.mxu0 0.0
    %1983 = vmatprep.subr.mxu0 0.0
    %1984 = vmatpush2.msra.mxu0 0.0
    %1985 = vmatprep.subr.mxu0 0.0
    %1986 = vmatpush2.msra.mxu0 0.0
    %1987 = vmatprep.mubr.f32.mxu0 0.0
    %1988 = vmatmul.mubr.f32.gmra.mxu0 %v1921
    %v1989 = vpop.f32.mrf.mxu0
    %v1990 = vadd.f32 %v1915, %v1989
    %v1991 = vpop.f32.mrf.mxu0
    %1992 = vdwg.mxu0
    %v1993 = vlaneseq
    %v1994 = vshrl.u32 %v1993, 7
    %v1995 = vsub.s32 0, %v1994
    %v1996 = vrot.slane %v1842, %v1995
    %v1997 = vadd.f32 %v1990, %v1996
    %v1998 = vlaneseq
    %v1999 = vand.u32 %v1998, 127
    %vm2000 = vcmp.eq.s32.totalorder %v1999, 0
    %v2001 = vmax.f32 %v1997, 0.0
    %vm2002 = vcmp.ne.f32.partialorder %v1997, %v1997
    %v2003 = vadd.f32 %v1997, 0.0
    %v2004 = vand.u32 2147483647, %v1997
    %v2005 = vsub.f32 0.0, %v2004
    %v2006 = vmul.f32 %v2005, 1.442695
    %v2007 = vpow.pop %v2006
    %v2008 = vadd.f32 %v2007, 1.0
    %v2009 = vlog2.pop %v2008
    %v2010 = vmul.f32 %v2009, 0.6931472
    %v2011 = vmul.f32 -0.5, %v2007
    %v2012 = vadd.f32 %v2011, 1.0
    %v2013 = vmul.f32 %v2012, %v2007
    %v2014 = vand.u32 2147483647, %v2007
    %vm2015 = vcmp.lt.f32.partialorder %v2014, 0.0004427343
    %v2016 = vsel %vm2015, %v2013, %v2010
    %v2017 = vadd.f32 %v2001, %v2016
    %v2018 = vsel %vm2002, %v2003, %v2017
    %v2019 = vadd.f32 %v2018, 1e-06
    %v2020 = vsel %vm2000, %v1997, %v2019
    %vm2021 = vcmask 15360
    %2022 = vst.msk [vmem:[%s4] sm:$0xff] %vm2021, %v2020
    // Predicated region
    $region22: #{lstm_model_forward.1} parent=1 // pred_check
      _
    $region23: #{lstm_model_forward.1} parent=1 // pred_check_branch
      %2024 = sbr.rel (0) target = $region25
    $region24: #{lstm_model_forward.1} parent=1 // pred_region
      _
    $region25: #{lstm_model_forward.1} parent=1 // pred_fallthru
      _
    // Predicated region
    $region26: #{lstm_model_forward.1} parent=1 // pred_check
      _
    $region27: #{lstm_model_forward.1} parent=1 // pred_check_branch
      %2026 = sbr.rel (0) target = $region29
    $region28: #{lstm_model_forward.1} parent=1 // pred_region
      _
    $region29: #{lstm_model_forward.1} parent=1 // pred_fallthru
      _
    %2027 = vsyncpa [#allocation3], 1

</llo_original>
